<compile_context>
chip_gen: v7x
topology: tpu7x:2x2x1
jax: 0.10.0
libtpu: 0.0.40
codegen_flags: <defaults>
</compile_context>

<pallas_src>
import math
from functools import partial

import jax
import jax.numpy as jnp
from jax.experimental import pallas as pl
from jax.experimental.pallas import tpu as pltpu


def mha_kernel(xq_ref, xkt_ref, xv_ref,
               wq_ref, bq_ref, wk_ref, bk_ref, wv_ref, bv_ref, wo_ref, bo_ref,
               *rest,
               num_heads, compute_dtype, return_attention):
    """One grid step == (batch element b, query tile qi); grid = (B, n_q_tiles).

    xq_ref : (1, tq,  D)    bf16 query-input tile
    xkt_ref: (1, D,   Skv)  bf16 key input, pre-transposed in the wrapper
    xv_ref : (1, Skv, D)    bf16 value input
    wq_ref : (H, D, depth)  bf16 per-head slices of Wq^T (1/sqrt(depth) folded in)
    bq_ref : (H, 1, depth)  f32  (scale folded in)
    wk_ref : (H, depth, D)  bf16 per-head row-slices of torch Wk (K^T = Wk_h @ xk^T)
    bk_ref : (H, depth, 1)  f32
    wv_ref : (H, D, depth)  bf16 per-head slices of Wv^T
    bv_ref : (H, 1, depth)  f32
    wo_ref : (H, depth, D)  bf16 per-head row-slices of Wo^T
    bo_ref : (1, D)         f32
    outputs: out (1, tq, D) [, attn (1, H, tq, Skv)]
    scratch: kt_scr (H, depth, Skv) bf16, v_scr (H, Skv, depth) bf16 (persist
             across query tiles), out_scr (tq, D) f32 accumulator
    """
    if return_attention:
        out_ref, attn_ref = rest[0], rest[1]
        kt_scr, v_scr, out_scr = rest[2], rest[3], rest[4]
    else:
        out_ref, attn_ref = rest[0], None
        kt_scr, v_scr, out_scr = rest[1], rest[2], rest[3]

    cdt = compute_dtype

    # ---- K/V projections: hoisted — run once per batch element (qi == 0) and
    # ---- kept in head-major VMEM scratch for every query tile of that batch.
    @pl.when(pl.program_id(1) == 0)
    def _project_kv():
        xkt = xkt_ref[0]                                     # (D, Skv) bf16
        xv = xv_ref[0]                                       # (Skv, D) bf16
        for h in range(num_heads):
            # K head produced directly transposed: (depth, Skv) = Wk_h @ xk^T.
            # Wide-N MXU matmul; the scores matmul below then needs no per-head
            # relayout/transpose of K.
            kt = (jnp.dot(wk_ref[h], xkt, preferred_element_type=jnp.float32)
                  + bk_ref[h])
            kt_scr[h] = kt.astype(cdt)
            # V head: (Skv, depth) = xv @ Wv_h.
            vh = (jnp.dot(xv, wv_ref[h], preferred_element_type=jnp.float32)
                  + bv_ref[h])
            v_scr[h] = vh.astype(cdt)

    xq = xq_ref[0]                                           # (tq, D) bf16

    # Output accumulator starts from the dense-layer bias; each head adds its
    # ctx_h @ Wo_h contribution (== concat(ctx) @ Wo^T, without any lane-sliced
    # concat or masked stores).
    out_scr[...] = jnp.broadcast_to(bo_ref[...], out_scr.shape)

    for h in range(num_heads):
        # Q head: (tq, depth). 1/sqrt(depth) is already folded into wq/bq.
        qh = (jnp.dot(xq, wq_ref[h], preferred_element_type=jnp.float32)
              + bq_ref[h]).astype(cdt)

        # scores = (q / sqrt(d)) @ K^T — K is stored pre-transposed per head.
        scores = jnp.dot(qh, kt_scr[h],
                         preferred_element_type=jnp.float32)  # (tq, Skv) f32

        # Numerically-stable softmax; statistics stay in f32 (v5e-friendly).
        m = jnp.max(scores, axis=-1, keepdims=True)
        e = jnp.exp(scores - m)
        denom = jnp.sum(e, axis=-1, keepdims=True)
        if attn_ref is not None:
            # Exact reciprocal on the returned-weights path so rows sum to 1 at
            # f32 precision (torch softmax parity).
            w = e * pl.reciprocal(denom)
            attn_ref[0, h] = w.astype(attn_ref.dtype)        # full (tq, Skv) slab
        else:
            w = e * pl.reciprocal(denom, approx=True)        # EUP slot, ctx only

        ctx = jnp.dot(w.astype(cdt), v_scr[h],
                      preferred_element_type=jnp.float32)     # (tq, depth) f32
        out_scr[...] += jnp.dot(ctx.astype(cdt), wo_ref[h],
                                preferred_element_type=jnp.float32)

    out_ref[0] = out_scr[...].astype(out_ref.dtype)


def _resident_spec(shape):
    """Constant-index BlockSpec (fetched once); single-buffered when supported."""
    index_map = lambda b, qi: (0,) * len(shape)
    try:
        return pl.BlockSpec(shape, index_map, pipeline_mode=pl.Buffered(1))
    except (TypeError, AttributeError):
        return pl.BlockSpec(shape, index_map)


def multi_head_attention(query, key, value, params, *, num_heads,
                         compute_dtype=jnp.bfloat16, return_attention=True,
                         attn_dtype=None):
    """params: dict with wq, bq, wk, bk, wv, bv, wo, bo (torch-style [D_out, D_in])."""
    B, Sq, D = query.shape
    _, Skv, _ = key.shape
    assert key.shape == (B, Skv, D) and value.shape == (B, Skv, D)
    assert D % num_heads == 0
    depth = D // num_heads
    inv_scale = 1.0 / math.sqrt(depth)
    out_dtype = query.dtype
    attn_dtype = query.dtype if attn_dtype is None else attn_dtype

    # --- One-time wrapper-side glue -----------------------------------------
    # Per-head weight slices so the kernel never lane-slices at sub-128 offsets
    # and never emits masked stores; 1/sqrt(depth) folded into the Q projection.
    wq_heads = (params["wq"].T * inv_scale).reshape(D, num_heads, depth) \
        .transpose(1, 0, 2).astype(compute_dtype)                    # (H, D, depth)
    bq_heads = (params["bq"] * inv_scale).reshape(num_heads, 1, depth).astype(jnp.float32)
    wk_rows = params["wk"].reshape(num_heads, depth, D).astype(compute_dtype)  # (H, depth, D)
    bk_heads = params["bk"].reshape(num_heads, depth, 1).astype(jnp.float32)
    wv_heads = params["wv"].T.reshape(D, num_heads, depth) \
        .transpose(1, 0, 2).astype(compute_dtype)                    # (H, D, depth)
    bv_heads = params["bv"].reshape(num_heads, 1, depth).astype(jnp.float32)
    wo_heads = params["wo"].T.reshape(num_heads, depth, D).astype(compute_dtype)  # (H, depth, D)
    bo = params["bo"].reshape(1, D).astype(jnp.float32)

    # bf16 activation DMA; key pre-transposed so K^T comes out of a plain matmul.
    xq = query.astype(compute_dtype)
    xkt = key.astype(compute_dtype).transpose(0, 2, 1)               # (B, D, Skv)
    xv = value.astype(compute_dtype)

    # Query-tile size: capped at 256 (v7x has half the VMEM of v5e/v6e) while the
    # (batch x q-tiles) grid still exposes parallel steps for both v7x cores.
    tq = Sq
    for cand in (256, 128, 64, 32, 16, 8):
        if Sq % cand == 0:
            tq = cand
            break
    n_q_tiles = Sq // tq
    grid = (B, n_q_tiles)

    # VMEM budget from the actual tile sizes, clamped to this chip's physical VMEM.
    wb = jnp.dtype(compute_dtype).itemsize
    ob = jnp.dtype(out_dtype).itemsize
    ab = jnp.dtype(attn_dtype).itemsize
    est = (2 * tq * D * wb                       # xq tile (double-buffered)
           + 2 * 2 * Skv * D * wb                # xk^T + xv blocks (double-buffered)
           + 4 * D * D * wb + 4 * D * 4          # resident weights + biases
           + 2 * tq * D * ob                     # output tile (double-buffered)
           + (2 * num_heads * tq * Skv * ab if return_attention else 0)
           + 2 * Skv * D * wb                    # K^T / V head-major scratch
           + tq * D * 4                          # f32 output accumulator
           + 2 * tq * Skv * 4)                   # live scores / exp intermediates
    try:
        vmem_cap = int(pltpu.get_tpu_info().vmem_capacity_bytes)
    except Exception:
        vmem_cap = 64 * 1024 * 1024              # conservative (v7x) fallback
    vmem_limit = int(min(int(0.9 * vmem_cap),
                         max(32 * 1024 * 1024, int(1.5 * est))))

    x_q_spec = pl.BlockSpec((1, tq, D), lambda b, qi: (b, qi, 0))
    x_kt_spec = pl.BlockSpec((1, D, Skv), lambda b, qi: (b, 0, 0))
    x_v_spec = pl.BlockSpec((1, Skv, D), lambda b, qi: (b, 0, 0))

    in_specs = [
        x_q_spec, x_kt_spec, x_v_spec,
        _resident_spec((num_heads, D, depth)), _resident_spec((num_heads, 1, depth)),
        _resident_spec((num_heads, depth, D)), _resident_spec((num_heads, depth, 1)),
        _resident_spec((num_heads, D, depth)), _resident_spec((num_heads, 1, depth)),
        _resident_spec((num_heads, depth, D)), _resident_spec((1, D)),
    ]

    out_shapes = [jax.ShapeDtypeStruct((B, Sq, D), out_dtype)]
    out_specs = [pl.BlockSpec((1, tq, D), lambda b, qi: (b, qi, 0))]
    if return_attention:
        out_shapes.append(jax.ShapeDtypeStruct((B, num_heads, Sq, Skv), attn_dtype))
        out_specs.append(pl.BlockSpec((1, num_heads, tq, Skv),
                                      lambda b, qi: (b, 0, qi, 0)))

    kernel = partial(mha_kernel, num_heads=num_heads,
                     compute_dtype=compute_dtype,
                     return_attention=return_attention)

    results = pl.pallas_call(
        kernel,
        out_shape=tuple(out_shapes),
        grid_spec=pltpu.PrefetchScalarGridSpec(
            num_scalar_prefetch=0,
            grid=grid,
            in_specs=in_specs,
            out_specs=out_specs,
            scratch_shapes=[
                pltpu.VMEM((num_heads, depth, Skv), compute_dtype),  # K^T heads
                pltpu.VMEM((num_heads, Skv, depth), compute_dtype),  # V heads
                pltpu.VMEM((tq, D), jnp.float32),                    # out accumulator
            ],
        ),
        compiler_params=pltpu.CompilerParams(
            # Batch shards across v7x's two cores; qi must be 'arbitrary' because
            # the K/V scratch persists across query tiles of one batch element.
            dimension_semantics=("parallel", "arbitrary"),
            vmem_limit_bytes=vmem_limit),
    )(xq, xkt, xv, wq_heads, bq_heads, wk_rows, bk_heads,
      wv_heads, bv_heads, wo_heads, bo)

    if return_attention:
        return results[0], results[1]
    return results[0]


def reference(query, key, value, params, *, num_heads):
    """Pure-JAX (f32) reference mirroring the PyTorch forward."""
    B, S, D = query.shape
    depth = D // num_heads

    def lin(x, w, b):
        return x @ w.T + b

    def split(x):
        return x.reshape(B, -1, num_heads, depth).transpose(0, 2, 1, 3)

    q = split(lin(query, params["wq"], params["bq"]))
    k = split(lin(key, params["wk"], params["bk"]))
    v = split(lin(value, params["wv"], params["bv"]))
    logits = jnp.einsum("bhqd,bhkd->bhqk", q, k) / math.sqrt(depth)
    w = jax.nn.softmax(logits, axis=-1)
    o = jnp.einsum("bhqk,bhkd->bhqd", w, v)
    o = o.transpose(0, 2, 1, 3).reshape(B, -1, D)
    return lin(o, params["wo"], params["bo"]), w


if __name__ == "__main__":
    B, S, D, H = 2, 8, 32, 4

    root = jax.random.PRNGKey(0)
    keys = jax.random.split(root, 12)
    bound = 1.0 / math.sqrt(D)  # torch nn.Linear default init range

    params = {
        "wq": jax.random.uniform(keys[0], (D, D), jnp.float32, -bound, bound),
        "bq": jax.random.uniform(keys[1], (D,), jnp.float32, -bound, bound),
        "wk": jax.random.uniform(keys[2], (D, D), jnp.float32, -bound, bound),
        "bk": jax.random.uniform(keys[3], (D,), jnp.float32, -bound, bound),
        "wv": jax.random.uniform(keys[4], (D, D), jnp.float32, -bound, bound),
        "bv": jax.random.uniform(keys[5], (D,), jnp.float32, -bound, bound),
        "wo": jax.random.uniform(keys[6], (D, D), jnp.float32, -bound, bound),
        "bo": jax.random.uniform(keys[7], (D,), jnp.float32, -bound, bound),
    }

    query = jax.random.normal(keys[8], (B, S, D), jnp.float32)
    key = jax.random.normal(keys[9], (B, S, D), jnp.float32)
    value = jax.random.normal(keys[10], (B, S, D), jnp.float32)

    out, attn = multi_head_attention(query, key, value, params, num_heads=H)
    out = jax.block_until_ready(out)
    attn = jax.block_until_ready(attn)

    ref_out, ref_attn = reference(query, key, value, params, num_heads=H)
    assert out.shape == (B, S, D) and attn.shape == (B, H, S, S)
    # bf16 MXU operands -> compare against the f32 reference with loosened
    # tolerances (logit-level deviation is ~1e-2).
    assert jnp.allclose(out, ref_out, atol=3e-2, rtol=3e-2)
    assert jnp.allclose(attn, ref_attn, atol=2e-2, rtol=2e-2)
    assert jnp.allclose(attn.sum(-1), 1.0, atol=1e-3)

    print("KERNEL_OK")
</pallas_src>

<mosaic_0001>
module attributes {stable_mosaic.version = 11 : i64} {
  func.func @mha_kernel(%arg0: i32, %arg1: i32, %arg2: memref<1x8x32xbf16, #tpu.memory_space<vmem>>, %arg3: memref<1x32x8xbf16, #tpu.memory_space<vmem>>, %arg4: memref<1x8x32xbf16, #tpu.memory_space<vmem>>, %arg5: memref<4x32x8xbf16, #tpu.memory_space<vmem>>, %arg6: memref<4x1x8xf32, #tpu.memory_space<vmem>>, %arg7: memref<4x8x32xbf16, #tpu.memory_space<vmem>>, %arg8: memref<4x8x1xf32, #tpu.memory_space<vmem>>, %arg9: memref<4x32x8xbf16, #tpu.memory_space<vmem>>, %arg10: memref<4x1x8xf32, #tpu.memory_space<vmem>>, %arg11: memref<4x8x32xbf16, #tpu.memory_space<vmem>>, %arg12: memref<1x32xf32, #tpu.memory_space<vmem>>, %arg13: memref<1x8x32xf32, #tpu.memory_space<vmem>>, %arg14: memref<1x4x8x8xf32, #tpu.memory_space<vmem>>, %arg15: memref<4x8x8xbf16, #tpu.memory_space<vmem>>, %arg16: memref<4x8x8xbf16, #tpu.memory_space<vmem>>, %arg17: memref<8x32xf32, #tpu.memory_space<vmem>>) attributes {dimension_semantics = [#tpu.dimension_semantics<parallel>, #tpu.dimension_semantics<arbitrary>], iteration_bounds = array<i64: 2, 1>, scalar_prefetch = 0 : i64, scratch_operands = 3 : i64, tpu.core_type = #tpu.core_type<tc>, window_params = [{transform_indices = @transform_0, window_bounds = array<i64: 1, 8, 32>}, {transform_indices = @transform_1, window_bounds = array<i64: 1, 32, 8>}, {transform_indices = @transform_2, window_bounds = array<i64: 1, 8, 32>}, {pipeline_mode = #tpu.pipeline_mode<synchronous>, transform_indices = @transform_3, window_bounds = array<i64: 4, 32, 8>}, {pipeline_mode = #tpu.pipeline_mode<synchronous>, transform_indices = @transform_4, window_bounds = array<i64: 4, 1, 8>}, {pipeline_mode = #tpu.pipeline_mode<synchronous>, transform_indices = @transform_5, window_bounds = array<i64: 4, 8, 32>}, {pipeline_mode = #tpu.pipeline_mode<synchronous>, transform_indices = @transform_6, window_bounds = array<i64: 4, 8, 1>}, {pipeline_mode = #tpu.pipeline_mode<synchronous>, transform_indices = @transform_7, window_bounds = array<i64: 4, 32, 8>}, {pipeline_mode = #tpu.pipeline_mode<synchronous>, transform_indices = @transform_8, window_bounds = array<i64: 4, 1, 8>}, {pipeline_mode = #tpu.pipeline_mode<synchronous>, transform_indices = @transform_9, window_bounds = array<i64: 4, 8, 32>}, {pipeline_mode = #tpu.pipeline_mode<synchronous>, transform_indices = @transform_10, window_bounds = array<i64: 1, 32>}, {transform_indices = @transform_11, window_bounds = array<i64: 1, 8, 32>}, {transform_indices = @transform_12, window_bounds = array<i64: 1, 4, 8, 8>}]} {
    %c0_i32 = arith.constant 0 : i32
    %0 = arith.cmpi eq, %arg1, %c0_i32 : i32
    %1 = arith.extui %0 : i1 to i32
    %c0_i32_0 = arith.constant 0 : i32
    %2 = arith.cmpi ne, %1, %c0_i32_0 : i32
    scf.if %2 {
      %c0_124 = arith.constant 0 : index
      %c0_125 = arith.constant 0 : index
      %c0_126 = arith.constant 0 : index
      %153 = vector.load %arg3[%c0_124, %c0_125, %c0_126] : memref<1x32x8xbf16, #tpu.memory_space<vmem>>, vector<1x32x8xbf16>
      %154 = vector.shape_cast %153 : vector<1x32x8xbf16> to vector<32x8xbf16>
      %c0_127 = arith.constant 0 : index
      %c0_128 = arith.constant 0 : index
      %c0_129 = arith.constant 0 : index
      %155 = vector.load %arg4[%c0_127, %c0_128, %c0_129] : memref<1x8x32xbf16, #tpu.memory_space<vmem>>, vector<1x8x32xbf16>
      %156 = vector.shape_cast %155 : vector<1x8x32xbf16> to vector<8x32xbf16>
      %c0_130 = arith.constant 0 : index
      %c0_131 = arith.constant 0 : index
      %c0_132 = arith.constant 0 : index
      %157 = vector.load %arg7[%c0_130, %c0_131, %c0_132] : memref<4x8x32xbf16, #tpu.memory_space<vmem>>, vector<1x8x32xbf16>
      %158 = vector.shape_cast %157 : vector<1x8x32xbf16> to vector<8x32xbf16>
      %cst_133 = arith.constant dense<0.000000e+00> : vector<8x8xf32>
      %159 = tpu.matmul %158, %154, %cst_133 {dimension_numbers = #tpu.dot_dimension_numbers<[1], [0], [0], [1], [0, 0, 1, 1], [], []>} : vector<8x32xbf16>, vector<32x8xbf16>, vector<8x8xf32> -> vector<8x8xf32>
      %c0_134 = arith.constant 0 : index
      %c0_135 = arith.constant 0 : index
      %c0_136 = arith.constant 0 : index
      %160 = vector.load %arg8[%c0_134, %c0_135, %c0_136] : memref<4x8x1xf32, #tpu.memory_space<vmem>>, vector<1x8x1xf32>
      %161 = vector.shape_cast %160 : vector<1x8x1xf32> to vector<8x1xf32>
      %162 = vector.broadcast %161 : vector<8x1xf32> to vector<8x8xf32>
      %163 = arith.addf %159, %162 : vector<8x8xf32>
      %164 = arith.truncf %163 : vector<8x8xf32> to vector<8x8xbf16>
      %c0_137 = arith.constant 0 : index
      %c0_138 = arith.constant 0 : index
      %c0_139 = arith.constant 0 : index
      %165 = vector.load %arg15[%c0_137, %c0_138, %c0_139] : memref<4x8x8xbf16, #tpu.memory_space<vmem>>, vector<1x8x8xbf16>
      %166 = vector.shape_cast %165 : vector<1x8x8xbf16> to vector<8x8xbf16>
      %167 = vector.shape_cast %164 : vector<8x8xbf16> to vector<1x8x8xbf16>
      tpu.vector_store %arg15[%c0_137, %c0_138, %c0_139], %167 {strides = array<i32>} : memref<4x8x8xbf16, #tpu.memory_space<vmem>>, vector<1x8x8xbf16>,
      %c0_140 = arith.constant 0 : index
      %c0_141 = arith.constant 0 : index
      %c0_142 = arith.constant 0 : index
      %168 = vector.load %arg9[%c0_140, %c0_141, %c0_142] : memref<4x32x8xbf16, #tpu.memory_space<vmem>>, vector<1x32x8xbf16>
      %169 = vector.shape_cast %168 : vector<1x32x8xbf16> to vector<32x8xbf16>
      %cst_143 = arith.constant dense<0.000000e+00> : vector<8x8xf32>
      %170 = tpu.matmul %156, %169, %cst_143 {dimension_numbers = #tpu.dot_dimension_numbers<[1], [0], [0], [1], [0, 0, 1, 1], [], []>} : vector<8x32xbf16>, vector<32x8xbf16>, vector<8x8xf32> -> vector<8x8xf32>
      %c0_144 = arith.constant 0 : index
      %c0_145 = arith.constant 0 : index
      %c0_146 = arith.constant 0 : index
      %171 = vector.load %arg10[%c0_144, %c0_145, %c0_146] : memref<4x1x8xf32, #tpu.memory_space<vmem>>, vector<1x1x8xf32>
      %172 = vector.shape_cast %171 : vector<1x1x8xf32> to vector<1x8xf32>
      %173 = vector.broadcast %172 : vector<1x8xf32> to vector<8x8xf32>
      %174 = arith.addf %170, %173 : vector<8x8xf32>
      %175 = arith.truncf %174 : vector<8x8xf32> to vector<8x8xbf16>
      %c0_147 = arith.constant 0 : index
      %c0_148 = arith.constant 0 : index
      %c0_149 = arith.constant 0 : index
      %176 = vector.load %arg16[%c0_147, %c0_148, %c0_149] : memref<4x8x8xbf16, #tpu.memory_space<vmem>>, vector<1x8x8xbf16>
      %177 = vector.shape_cast %176 : vector<1x8x8xbf16> to vector<8x8xbf16>
      %178 = vector.shape_cast %175 : vector<8x8xbf16> to vector<1x8x8xbf16>
      tpu.vector_store %arg16[%c0_147, %c0_148, %c0_149], %178 {strides = array<i32>} : memref<4x8x8xbf16, #tpu.memory_space<vmem>>, vector<1x8x8xbf16>,
      %c1_150 = arith.constant 1 : index
      %c0_151 = arith.constant 0 : index
      %c0_152 = arith.constant 0 : index
      %179 = vector.load %arg7[%c1_150, %c0_151, %c0_152] : memref<4x8x32xbf16, #tpu.memory_space<vmem>>, vector<1x8x32xbf16>
      %180 = vector.shape_cast %179 : vector<1x8x32xbf16> to vector<8x32xbf16>
      %cst_153 = arith.constant dense<0.000000e+00> : vector<8x8xf32>
      %181 = tpu.matmul %180, %154, %cst_153 {dimension_numbers = #tpu.dot_dimension_numbers<[1], [0], [0], [1], [0, 0, 1, 1], [], []>} : vector<8x32xbf16>, vector<32x8xbf16>, vector<8x8xf32> -> vector<8x8xf32>
      %c1_154 = arith.constant 1 : index
      %c0_155 = arith.constant 0 : index
      %c0_156 = arith.constant 0 : index
      %182 = vector.load %arg8[%c1_154, %c0_155, %c0_156] : memref<4x8x1xf32, #tpu.memory_space<vmem>>, vector<1x8x1xf32>
      %183 = vector.shape_cast %182 : vector<1x8x1xf32> to vector<8x1xf32>
      %184 = vector.broadcast %183 : vector<8x1xf32> to vector<8x8xf32>
      %185 = arith.addf %181, %184 : vector<8x8xf32>
      %186 = arith.truncf %185 : vector<8x8xf32> to vector<8x8xbf16>
      %c1_157 = arith.constant 1 : index
      %c0_158 = arith.constant 0 : index
      %c0_159 = arith.constant 0 : index
      %187 = vector.load %arg15[%c1_157, %c0_158, %c0_159] : memref<4x8x8xbf16, #tpu.memory_space<vmem>>, vector<1x8x8xbf16>
      %188 = vector.shape_cast %187 : vector<1x8x8xbf16> to vector<8x8xbf16>
      %189 = vector.shape_cast %186 : vector<8x8xbf16> to vector<1x8x8xbf16>
      tpu.vector_store %arg15[%c1_157, %c0_158, %c0_159], %189 {strides = array<i32>} : memref<4x8x8xbf16, #tpu.memory_space<vmem>>, vector<1x8x8xbf16>,
      %c1_160 = arith.constant 1 : index
      %c0_161 = arith.constant 0 : index
      %c0_162 = arith.constant 0 : index
      %190 = vector.load %arg9[%c1_160, %c0_161, %c0_162] : memref<4x32x8xbf16, #tpu.memory_space<vmem>>, vector<1x32x8xbf16>
      %191 = vector.shape_cast %190 : vector<1x32x8xbf16> to vector<32x8xbf16>
      %cst_163 = arith.constant dense<0.000000e+00> : vector<8x8xf32>
      %192 = tpu.matmul %156, %191, %cst_163 {dimension_numbers = #tpu.dot_dimension_numbers<[1], [0], [0], [1], [0, 0, 1, 1], [], []>} : vector<8x32xbf16>, vector<32x8xbf16>, vector<8x8xf32> -> vector<8x8xf32>
      %c1_164 = arith.constant 1 : index
      %c0_165 = arith.constant 0 : index
      %c0_166 = arith.constant 0 : index
      %193 = vector.load %arg10[%c1_164, %c0_165, %c0_166] : memref<4x1x8xf32, #tpu.memory_space<vmem>>, vector<1x1x8xf32>
      %194 = vector.shape_cast %193 : vector<1x1x8xf32> to vector<1x8xf32>
      %195 = vector.broadcast %194 : vector<1x8xf32> to vector<8x8xf32>
      %196 = arith.addf %192, %195 : vector<8x8xf32>
      %197 = arith.truncf %196 : vector<8x8xf32> to vector<8x8xbf16>
      %c1_167 = arith.constant 1 : index
      %c0_168 = arith.constant 0 : index
      %c0_169 = arith.constant 0 : index
      %198 = vector.load %arg16[%c1_167, %c0_168, %c0_169] : memref<4x8x8xbf16, #tpu.memory_space<vmem>>, vector<1x8x8xbf16>
      %199 = vector.shape_cast %198 : vector<1x8x8xbf16> to vector<8x8xbf16>
      %200 = vector.shape_cast %197 : vector<8x8xbf16> to vector<1x8x8xbf16>
      tpu.vector_store %arg16[%c1_167, %c0_168, %c0_169], %200 {strides = array<i32>} : memref<4x8x8xbf16, #tpu.memory_space<vmem>>, vector<1x8x8xbf16>,
      %c2_170 = arith.constant 2 : index
      %c0_171 = arith.constant 0 : index
      %c0_172 = arith.constant 0 : index
      %201 = vector.load %arg7[%c2_170, %c0_171, %c0_172] : memref<4x8x32xbf16, #tpu.memory_space<vmem>>, vector<1x8x32xbf16>
      %202 = vector.shape_cast %201 : vector<1x8x32xbf16> to vector<8x32xbf16>
      %cst_173 = arith.constant dense<0.000000e+00> : vector<8x8xf32>
      %203 = tpu.matmul %202, %154, %cst_173 {dimension_numbers = #tpu.dot_dimension_numbers<[1], [0], [0], [1], [0, 0, 1, 1], [], []>} : vector<8x32xbf16>, vector<32x8xbf16>, vector<8x8xf32> -> vector<8x8xf32>
      %c2_174 = arith.constant 2 : index
      %c0_175 = arith.constant 0 : index
      %c0_176 = arith.constant 0 : index
      %204 = vector.load %arg8[%c2_174, %c0_175, %c0_176] : memref<4x8x1xf32, #tpu.memory_space<vmem>>, vector<1x8x1xf32>
      %205 = vector.shape_cast %204 : vector<1x8x1xf32> to vector<8x1xf32>
      %206 = vector.broadcast %205 : vector<8x1xf32> to vector<8x8xf32>
      %207 = arith.addf %203, %206 : vector<8x8xf32>
      %208 = arith.truncf %207 : vector<8x8xf32> to vector<8x8xbf16>
      %c2_177 = arith.constant 2 : index
      %c0_178 = arith.constant 0 : index
      %c0_179 = arith.constant 0 : index
      %209 = vector.load %arg15[%c2_177, %c0_178, %c0_179] : memref<4x8x8xbf16, #tpu.memory_space<vmem>>, vector<1x8x8xbf16>
      %210 = vector.shape_cast %209 : vector<1x8x8xbf16> to vector<8x8xbf16>
      %211 = vector.shape_cast %208 : vector<8x8xbf16> to vector<1x8x8xbf16>
      tpu.vector_store %arg15[%c2_177, %c0_178, %c0_179], %211 {strides = array<i32>} : memref<4x8x8xbf16, #tpu.memory_space<vmem>>, vector<1x8x8xbf16>,
      %c2_180 = arith.constant 2 : index
      %c0_181 = arith.constant 0 : index
      %c0_182 = arith.constant 0 : index
      %212 = vector.load %arg9[%c2_180, %c0_181, %c0_182] : memref<4x32x8xbf16, #tpu.memory_space<vmem>>, vector<1x32x8xbf16>
      %213 = vector.shape_cast %212 : vector<1x32x8xbf16> to vector<32x8xbf16>
      %cst_183 = arith.constant dense<0.000000e+00> : vector<8x8xf32>
      %214 = tpu.matmul %156, %213, %cst_183 {dimension_numbers = #tpu.dot_dimension_numbers<[1], [0], [0], [1], [0, 0, 1, 1], [], []>} : vector<8x32xbf16>, vector<32x8xbf16>, vector<8x8xf32> -> vector<8x8xf32>
      %c2_184 = arith.constant 2 : index
      %c0_185 = arith.constant 0 : index
      %c0_186 = arith.constant 0 : index
      %215 = vector.load %arg10[%c2_184, %c0_185, %c0_186] : memref<4x1x8xf32, #tpu.memory_space<vmem>>, vector<1x1x8xf32>
      %216 = vector.shape_cast %215 : vector<1x1x8xf32> to vector<1x8xf32>
      %217 = vector.broadcast %216 : vector<1x8xf32> to vector<8x8xf32>
      %218 = arith.addf %214, %217 : vector<8x8xf32>
      %219 = arith.truncf %218 : vector<8x8xf32> to vector<8x8xbf16>
      %c2_187 = arith.constant 2 : index
      %c0_188 = arith.constant 0 : index
      %c0_189 = arith.constant 0 : index
      %220 = vector.load %arg16[%c2_187, %c0_188, %c0_189] : memref<4x8x8xbf16, #tpu.memory_space<vmem>>, vector<1x8x8xbf16>
      %221 = vector.shape_cast %220 : vector<1x8x8xbf16> to vector<8x8xbf16>
      %222 = vector.shape_cast %219 : vector<8x8xbf16> to vector<1x8x8xbf16>
      tpu.vector_store %arg16[%c2_187, %c0_188, %c0_189], %222 {strides = array<i32>} : memref<4x8x8xbf16, #tpu.memory_space<vmem>>, vector<1x8x8xbf16>,
      %c3_190 = arith.constant 3 : index
      %c0_191 = arith.constant 0 : index
      %c0_192 = arith.constant 0 : index
      %223 = vector.load %arg7[%c3_190, %c0_191, %c0_192] : memref<4x8x32xbf16, #tpu.memory_space<vmem>>, vector<1x8x32xbf16>
      %224 = vector.shape_cast %223 : vector<1x8x32xbf16> to vector<8x32xbf16>
      %cst_193 = arith.constant dense<0.000000e+00> : vector<8x8xf32>
      %225 = tpu.matmul %224, %154, %cst_193 {dimension_numbers = #tpu.dot_dimension_numbers<[1], [0], [0], [1], [0, 0, 1, 1], [], []>} : vector<8x32xbf16>, vector<32x8xbf16>, vector<8x8xf32> -> vector<8x8xf32>
      %c3_194 = arith.constant 3 : index
      %c0_195 = arith.constant 0 : index
      %c0_196 = arith.constant 0 : index
      %226 = vector.load %arg8[%c3_194, %c0_195, %c0_196] : memref<4x8x1xf32, #tpu.memory_space<vmem>>, vector<1x8x1xf32>
      %227 = vector.shape_cast %226 : vector<1x8x1xf32> to vector<8x1xf32>
      %228 = vector.broadcast %227 : vector<8x1xf32> to vector<8x8xf32>
      %229 = arith.addf %225, %228 : vector<8x8xf32>
      %230 = arith.truncf %229 : vector<8x8xf32> to vector<8x8xbf16>
      %c3_197 = arith.constant 3 : index
      %c0_198 = arith.constant 0 : index
      %c0_199 = arith.constant 0 : index
      %231 = vector.load %arg15[%c3_197, %c0_198, %c0_199] : memref<4x8x8xbf16, #tpu.memory_space<vmem>>, vector<1x8x8xbf16>
      %232 = vector.shape_cast %231 : vector<1x8x8xbf16> to vector<8x8xbf16>
      %233 = vector.shape_cast %230 : vector<8x8xbf16> to vector<1x8x8xbf16>
      tpu.vector_store %arg15[%c3_197, %c0_198, %c0_199], %233 {strides = array<i32>} : memref<4x8x8xbf16, #tpu.memory_space<vmem>>, vector<1x8x8xbf16>,
      %c3_200 = arith.constant 3 : index
      %c0_201 = arith.constant 0 : index
      %c0_202 = arith.constant 0 : index
      %234 = vector.load %arg9[%c3_200, %c0_201, %c0_202] : memref<4x32x8xbf16, #tpu.memory_space<vmem>>, vector<1x32x8xbf16>
      %235 = vector.shape_cast %234 : vector<1x32x8xbf16> to vector<32x8xbf16>
      %cst_203 = arith.constant dense<0.000000e+00> : vector<8x8xf32>
      %236 = tpu.matmul %156, %235, %cst_203 {dimension_numbers = #tpu.dot_dimension_numbers<[1], [0], [0], [1], [0, 0, 1, 1], [], []>} : vector<8x32xbf16>, vector<32x8xbf16>, vector<8x8xf32> -> vector<8x8xf32>
      %c3_204 = arith.constant 3 : index
      %c0_205 = arith.constant 0 : index
      %c0_206 = arith.constant 0 : index
      %237 = vector.load %arg10[%c3_204, %c0_205, %c0_206] : memref<4x1x8xf32, #tpu.memory_space<vmem>>, vector<1x1x8xf32>
      %238 = vector.shape_cast %237 : vector<1x1x8xf32> to vector<1x8xf32>
      %239 = vector.broadcast %238 : vector<1x8xf32> to vector<8x8xf32>
      %240 = arith.addf %236, %239 : vector<8x8xf32>
      %241 = arith.truncf %240 : vector<8x8xf32> to vector<8x8xbf16>
      %c3_207 = arith.constant 3 : index
      %c0_208 = arith.constant 0 : index
      %c0_209 = arith.constant 0 : index
      %242 = vector.load %arg16[%c3_207, %c0_208, %c0_209] : memref<4x8x8xbf16, #tpu.memory_space<vmem>>, vector<1x8x8xbf16>
      %243 = vector.shape_cast %242 : vector<1x8x8xbf16> to vector<8x8xbf16>
      %244 = vector.shape_cast %241 : vector<8x8xbf16> to vector<1x8x8xbf16>
      tpu.vector_store %arg16[%c3_207, %c0_208, %c0_209], %244 {strides = array<i32>} : memref<4x8x8xbf16, #tpu.memory_space<vmem>>, vector<1x8x8xbf16>,
    } else {
    }
    %c0 = arith.constant 0 : index
    %c0_1 = arith.constant 0 : index
    %c0_2 = arith.constant 0 : index
    %3 = vector.load %arg2[%c0, %c0_1, %c0_2] : memref<1x8x32xbf16, #tpu.memory_space<vmem>>, vector<1x8x32xbf16>
    %4 = vector.shape_cast %3 : vector<1x8x32xbf16> to vector<8x32xbf16>
    %c0_3 = arith.constant 0 : index
    %c0_4 = arith.constant 0 : index
    %5 = vector.load %arg12[%c0_3, %c0_4] : memref<1x32xf32, #tpu.memory_space<vmem>>, vector<1x32xf32>
    %6 = vector.shape_cast %5 : vector<1x32xf32> to vector<1x32xf32>
    %7 = vector.broadcast %6 : vector<1x32xf32> to vector<8x32xf32>
    %c0_5 = arith.constant 0 : index
    %c0_6 = arith.constant 0 : index
    %8 = vector.load %arg17[%c0_5, %c0_6] : memref<8x32xf32, #tpu.memory_space<vmem>>, vector<8x32xf32>
    tpu.vector_store %arg17[%c0_5, %c0_6], %7 {strides = array<i32>} : memref<8x32xf32, #tpu.memory_space<vmem>>, vector<8x32xf32>,
    %c0_7 = arith.constant 0 : index
    %c0_8 = arith.constant 0 : index
    %c0_9 = arith.constant 0 : index
    %9 = vector.load %arg5[%c0_7, %c0_8, %c0_9] : memref<4x32x8xbf16, #tpu.memory_space<vmem>>, vector<1x32x8xbf16>
    %10 = vector.shape_cast %9 : vector<1x32x8xbf16> to vector<32x8xbf16>
    %cst = arith.constant dense<0.000000e+00> : vector<8x8xf32>
    %11 = tpu.matmul %4, %10, %cst {dimension_numbers = #tpu.dot_dimension_numbers<[1], [0], [0], [1], [0, 0, 1, 1], [], []>} : vector<8x32xbf16>, vector<32x8xbf16>, vector<8x8xf32> -> vector<8x8xf32>
    %c0_10 = arith.constant 0 : index
    %c0_11 = arith.constant 0 : index
    %c0_12 = arith.constant 0 : index
    %12 = vector.load %arg6[%c0_10, %c0_11, %c0_12] : memref<4x1x8xf32, #tpu.memory_space<vmem>>, vector<1x1x8xf32>
    %13 = vector.shape_cast %12 : vector<1x1x8xf32> to vector<1x8xf32>
    %14 = vector.broadcast %13 : vector<1x8xf32> to vector<8x8xf32>
    %15 = arith.addf %11, %14 : vector<8x8xf32>
    %16 = arith.truncf %15 : vector<8x8xf32> to vector<8x8xbf16>
    %c0_13 = arith.constant 0 : index
    %c0_14 = arith.constant 0 : index
    %c0_15 = arith.constant 0 : index
    %17 = vector.load %arg15[%c0_13, %c0_14, %c0_15] : memref<4x8x8xbf16, #tpu.memory_space<vmem>>, vector<1x8x8xbf16>
    %18 = vector.shape_cast %17 : vector<1x8x8xbf16> to vector<8x8xbf16>
    %cst_16 = arith.constant dense<0.000000e+00> : vector<8x8xf32>
    %19 = tpu.matmul %16, %18, %cst_16 {dimension_numbers = #tpu.dot_dimension_numbers<[1], [0], [0], [1], [0, 0, 1, 1], [], []>} : vector<8x8xbf16>, vector<8x8xbf16>, vector<8x8xf32> -> vector<8x8xf32>
    %cst_17 = arith.constant dense<0xFF800000> : vector<8xf32>
    %20 = vector.multi_reduction <maximumf>, %19, %cst_17 [1] : vector<8x8xf32> to vector<8xf32>
    %21 = vector.shape_cast %20 : vector<8xf32> to vector<8x1xf32>
    %22 = vector.broadcast %21 : vector<8x1xf32> to vector<8x8xf32>
    %23 = arith.subf %19, %22 : vector<8x8xf32>
    %24 = math.exp %23 : vector<8x8xf32>
    %cst_18 = arith.constant dense<0.000000e+00> : vector<8xf32>
    %25 = vector.multi_reduction <add>, %24, %cst_18 [1] : vector<8x8xf32> to vector<8xf32>
    %26 = vector.shape_cast %25 : vector<8xf32> to vector<8x1xf32>
    %27 = tpu.reciprocal %26 : vector<8x1xf32> -> vector<8x1xf32>
    %28 = vector.broadcast %27 : vector<8x1xf32> to vector<8x8xf32>
    %29 = arith.mulf %24, %28 : vector<8x8xf32>
    %c0_19 = arith.constant 0 : index
    %c0_20 = arith.constant 0 : index
    %c0_21 = arith.constant 0 : index
    %c0_22 = arith.constant 0 : index
    %30 = vector.load %arg14[%c0_19, %c0_20, %c0_21, %c0_22] : memref<1x4x8x8xf32, #tpu.memory_space<vmem>>, vector<1x1x8x8xf32>
    %31 = vector.shape_cast %30 : vector<1x1x8x8xf32> to vector<8x8xf32>
    %32 = vector.shape_cast %29 : vector<8x8xf32> to vector<1x1x8x8xf32>
    tpu.vector_store %arg14[%c0_19, %c0_20, %c0_21, %c0_22], %32 {strides = array<i32>} : memref<1x4x8x8xf32, #tpu.memory_space<vmem>>, vector<1x1x8x8xf32>,
    %33 = arith.truncf %29 : vector<8x8xf32> to vector<8x8xbf16>
    %c0_23 = arith.constant 0 : index
    %c0_24 = arith.constant 0 : index
    %c0_25 = arith.constant 0 : index
    %34 = vector.load %arg16[%c0_23, %c0_24, %c0_25] : memref<4x8x8xbf16, #tpu.memory_space<vmem>>, vector<1x8x8xbf16>
    %35 = vector.shape_cast %34 : vector<1x8x8xbf16> to vector<8x8xbf16>
    %cst_26 = arith.constant dense<0.000000e+00> : vector<8x8xf32>
    %36 = tpu.matmul %33, %35, %cst_26 {dimension_numbers = #tpu.dot_dimension_numbers<[1], [0], [0], [1], [0, 0, 1, 1], [], []>} : vector<8x8xbf16>, vector<8x8xbf16>, vector<8x8xf32> -> vector<8x8xf32>
    %c0_27 = arith.constant 0 : index
    %c0_28 = arith.constant 0 : index
    %37 = vector.load %arg17[%c0_27, %c0_28] : memref<8x32xf32, #tpu.memory_space<vmem>>, vector<8x32xf32>
    %38 = arith.truncf %36 : vector<8x8xf32> to vector<8x8xbf16>
    %c0_29 = arith.constant 0 : index
    %c0_30 = arith.constant 0 : index
    %c0_31 = arith.constant 0 : index
    %39 = vector.load %arg11[%c0_29, %c0_30, %c0_31] : memref<4x8x32xbf16, #tpu.memory_space<vmem>>, vector<1x8x32xbf16>
    %40 = vector.shape_cast %39 : vector<1x8x32xbf16> to vector<8x32xbf16>
    %cst_32 = arith.constant dense<0.000000e+00> : vector<8x32xf32>
    %41 = tpu.matmul %38, %40, %cst_32 {dimension_numbers = #tpu.dot_dimension_numbers<[1], [0], [0], [1], [0, 0, 1, 1], [], []>} : vector<8x8xbf16>, vector<8x32xbf16>, vector<8x32xf32> -> vector<8x32xf32>
    %42 = arith.addf %37, %41 : vector<8x32xf32>
    %c0_33 = arith.constant 0 : index
    %c0_34 = arith.constant 0 : index
    %43 = vector.load %arg17[%c0_33, %c0_34] : memref<8x32xf32, #tpu.memory_space<vmem>>, vector<8x32xf32>
    tpu.vector_store %arg17[%c0_33, %c0_34], %42 {strides = array<i32>} : memref<8x32xf32, #tpu.memory_space<vmem>>, vector<8x32xf32>,
    %c1 = arith.constant 1 : index
    %c0_35 = arith.constant 0 : index
    %c0_36 = arith.constant 0 : index
    %44 = vector.load %arg5[%c1, %c0_35, %c0_36] : memref<4x32x8xbf16, #tpu.memory_space<vmem>>, vector<1x32x8xbf16>
    %45 = vector.shape_cast %44 : vector<1x32x8xbf16> to vector<32x8xbf16>
    %cst_37 = arith.constant dense<0.000000e+00> : vector<8x8xf32>
    %46 = tpu.matmul %4, %45, %cst_37 {dimension_numbers = #tpu.dot_dimension_numbers<[1], [0], [0], [1], [0, 0, 1, 1], [], []>} : vector<8x32xbf16>, vector<32x8xbf16>, vector<8x8xf32> -> vector<8x8xf32>
    %c1_38 = arith.constant 1 : index
    %c0_39 = arith.constant 0 : index
    %c0_40 = arith.constant 0 : index
    %47 = vector.load %arg6[%c1_38, %c0_39, %c0_40] : memref<4x1x8xf32, #tpu.memory_space<vmem>>, vector<1x1x8xf32>
    %48 = vector.shape_cast %47 : vector<1x1x8xf32> to vector<1x8xf32>
    %49 = vector.broadcast %48 : vector<1x8xf32> to vector<8x8xf32>
    %50 = arith.addf %46, %49 : vector<8x8xf32>
    %51 = arith.truncf %50 : vector<8x8xf32> to vector<8x8xbf16>
    %c1_41 = arith.constant 1 : index
    %c0_42 = arith.constant 0 : index
    %c0_43 = arith.constant 0 : index
    %52 = vector.load %arg15[%c1_41, %c0_42, %c0_43] : memref<4x8x8xbf16, #tpu.memory_space<vmem>>, vector<1x8x8xbf16>
    %53 = vector.shape_cast %52 : vector<1x8x8xbf16> to vector<8x8xbf16>
    %cst_44 = arith.constant dense<0.000000e+00> : vector<8x8xf32>
    %54 = tpu.matmul %51, %53, %cst_44 {dimension_numbers = #tpu.dot_dimension_numbers<[1], [0], [0], [1], [0, 0, 1, 1], [], []>} : vector<8x8xbf16>, vector<8x8xbf16>, vector<8x8xf32> -> vector<8x8xf32>
    %cst_45 = arith.constant dense<0xFF800000> : vector<8xf32>
    %55 = vector.multi_reduction <maximumf>, %54, %cst_45 [1] : vector<8x8xf32> to vector<8xf32>
    %56 = vector.shape_cast %55 : vector<8xf32> to vector<8x1xf32>
    %57 = vector.broadcast %56 : vector<8x1xf32> to vector<8x8xf32>
    %58 = arith.subf %54, %57 : vector<8x8xf32>
    %59 = math.exp %58 : vector<8x8xf32>
    %cst_46 = arith.constant dense<0.000000e+00> : vector<8xf32>
    %60 = vector.multi_reduction <add>, %59, %cst_46 [1] : vector<8x8xf32> to vector<8xf32>
    %61 = vector.shape_cast %60 : vector<8xf32> to vector<8x1xf32>
    %62 = tpu.reciprocal %61 : vector<8x1xf32> -> vector<8x1xf32>
    %63 = vector.broadcast %62 : vector<8x1xf32> to vector<8x8xf32>
    %64 = arith.mulf %59, %63 : vector<8x8xf32>
    %c0_47 = arith.constant 0 : index
    %c1_48 = arith.constant 1 : index
    %c0_49 = arith.constant 0 : index
    %c0_50 = arith.constant 0 : index
    %65 = vector.load %arg14[%c0_47, %c1_48, %c0_49, %c0_50] : memref<1x4x8x8xf32, #tpu.memory_space<vmem>>, vector<1x1x8x8xf32>
    %66 = vector.shape_cast %65 : vector<1x1x8x8xf32> to vector<8x8xf32>
    %67 = vector.shape_cast %64 : vector<8x8xf32> to vector<1x1x8x8xf32>
    tpu.vector_store %arg14[%c0_47, %c1_48, %c0_49, %c0_50], %67 {strides = array<i32>} : memref<1x4x8x8xf32, #tpu.memory_space<vmem>>, vector<1x1x8x8xf32>,
    %68 = arith.truncf %64 : vector<8x8xf32> to vector<8x8xbf16>
    %c1_51 = arith.constant 1 : index
    %c0_52 = arith.constant 0 : index
    %c0_53 = arith.constant 0 : index
    %69 = vector.load %arg16[%c1_51, %c0_52, %c0_53] : memref<4x8x8xbf16, #tpu.memory_space<vmem>>, vector<1x8x8xbf16>
    %70 = vector.shape_cast %69 : vector<1x8x8xbf16> to vector<8x8xbf16>
    %cst_54 = arith.constant dense<0.000000e+00> : vector<8x8xf32>
    %71 = tpu.matmul %68, %70, %cst_54 {dimension_numbers = #tpu.dot_dimension_numbers<[1], [0], [0], [1], [0, 0, 1, 1], [], []>} : vector<8x8xbf16>, vector<8x8xbf16>, vector<8x8xf32> -> vector<8x8xf32>
    %c0_55 = arith.constant 0 : index
    %c0_56 = arith.constant 0 : index
    %72 = vector.load %arg17[%c0_55, %c0_56] : memref<8x32xf32, #tpu.memory_space<vmem>>, vector<8x32xf32>
    %73 = arith.truncf %71 : vector<8x8xf32> to vector<8x8xbf16>
    %c1_57 = arith.constant 1 : index
    %c0_58 = arith.constant 0 : index
    %c0_59 = arith.constant 0 : index
    %74 = vector.load %arg11[%c1_57, %c0_58, %c0_59] : memref<4x8x32xbf16, #tpu.memory_space<vmem>>, vector<1x8x32xbf16>
    %75 = vector.shape_cast %74 : vector<1x8x32xbf16> to vector<8x32xbf16>
    %cst_60 = arith.constant dense<0.000000e+00> : vector<8x32xf32>
    %76 = tpu.matmul %73, %75, %cst_60 {dimension_numbers = #tpu.dot_dimension_numbers<[1], [0], [0], [1], [0, 0, 1, 1], [], []>} : vector<8x8xbf16>, vector<8x32xbf16>, vector<8x32xf32> -> vector<8x32xf32>
    %77 = arith.addf %72, %76 : vector<8x32xf32>
    %c0_61 = arith.constant 0 : index
    %c0_62 = arith.constant 0 : index
    %78 = vector.load %arg17[%c0_61, %c0_62] : memref<8x32xf32, #tpu.memory_space<vmem>>, vector<8x32xf32>
    tpu.vector_store %arg17[%c0_61, %c0_62], %77 {strides = array<i32>} : memref<8x32xf32, #tpu.memory_space<vmem>>, vector<8x32xf32>,
    %c2 = arith.constant 2 : index
    %c0_63 = arith.constant 0 : index
    %c0_64 = arith.constant 0 : index
    %79 = vector.load %arg5[%c2, %c0_63, %c0_64] : memref<4x32x8xbf16, #tpu.memory_space<vmem>>, vector<1x32x8xbf16>
    %80 = vector.shape_cast %79 : vector<1x32x8xbf16> to vector<32x8xbf16>
    %cst_65 = arith.constant dense<0.000000e+00> : vector<8x8xf32>
    %81 = tpu.matmul %4, %80, %cst_65 {dimension_numbers = #tpu.dot_dimension_numbers<[1], [0], [0], [1], [0, 0, 1, 1], [], []>} : vector<8x32xbf16>, vector<32x8xbf16>, vector<8x8xf32> -> vector<8x8xf32>
    %c2_66 = arith.constant 2 : index
    %c0_67 = arith.constant 0 : index
    %c0_68 = arith.constant 0 : index
    %82 = vector.load %arg6[%c2_66, %c0_67, %c0_68] : memref<4x1x8xf32, #tpu.memory_space<vmem>>, vector<1x1x8xf32>
    %83 = vector.shape_cast %82 : vector<1x1x8xf32> to vector<1x8xf32>
    %84 = vector.broadcast %83 : vector<1x8xf32> to vector<8x8xf32>
    %85 = arith.addf %81, %84 : vector<8x8xf32>
    %86 = arith.truncf %85 : vector<8x8xf32> to vector<8x8xbf16>
    %c2_69 = arith.constant 2 : index
    %c0_70 = arith.constant 0 : index
    %c0_71 = arith.constant 0 : index
    %87 = vector.load %arg15[%c2_69, %c0_70, %c0_71] : memref<4x8x8xbf16, #tpu.memory_space<vmem>>, vector<1x8x8xbf16>
    %88 = vector.shape_cast %87 : vector<1x8x8xbf16> to vector<8x8xbf16>
    %cst_72 = arith.constant dense<0.000000e+00> : vector<8x8xf32>
    %89 = tpu.matmul %86, %88, %cst_72 {dimension_numbers = #tpu.dot_dimension_numbers<[1], [0], [0], [1], [0, 0, 1, 1], [], []>} : vector<8x8xbf16>, vector<8x8xbf16>, vector<8x8xf32> -> vector<8x8xf32>
    %cst_73 = arith.constant dense<0xFF800000> : vector<8xf32>
    %90 = vector.multi_reduction <maximumf>, %89, %cst_73 [1] : vector<8x8xf32> to vector<8xf32>
    %91 = vector.shape_cast %90 : vector<8xf32> to vector<8x1xf32>
    %92 = vector.broadcast %91 : vector<8x1xf32> to vector<8x8xf32>
    %93 = arith.subf %89, %92 : vector<8x8xf32>
    %94 = math.exp %93 : vector<8x8xf32>
    %cst_74 = arith.constant dense<0.000000e+00> : vector<8xf32>
    %95 = vector.multi_reduction <add>, %94, %cst_74 [1] : vector<8x8xf32> to vector<8xf32>
    %96 = vector.shape_cast %95 : vector<8xf32> to vector<8x1xf32>
    %97 = tpu.reciprocal %96 : vector<8x1xf32> -> vector<8x1xf32>
    %98 = vector.broadcast %97 : vector<8x1xf32> to vector<8x8xf32>
    %99 = arith.mulf %94, %98 : vector<8x8xf32>
    %c0_75 = arith.constant 0 : index
    %c2_76 = arith.constant 2 : index
    %c0_77 = arith.constant 0 : index
    %c0_78 = arith.constant 0 : index
    %100 = vector.load %arg14[%c0_75, %c2_76, %c0_77, %c0_78] : memref<1x4x8x8xf32, #tpu.memory_space<vmem>>, vector<1x1x8x8xf32>
    %101 = vector.shape_cast %100 : vector<1x1x8x8xf32> to vector<8x8xf32>
    %102 = vector.shape_cast %99 : vector<8x8xf32> to vector<1x1x8x8xf32>
    tpu.vector_store %arg14[%c0_75, %c2_76, %c0_77, %c0_78], %102 {strides = array<i32>} : memref<1x4x8x8xf32, #tpu.memory_space<vmem>>, vector<1x1x8x8xf32>,
    %103 = arith.truncf %99 : vector<8x8xf32> to vector<8x8xbf16>
    %c2_79 = arith.constant 2 : index
    %c0_80 = arith.constant 0 : index
    %c0_81 = arith.constant 0 : index
    %104 = vector.load %arg16[%c2_79, %c0_80, %c0_81] : memref<4x8x8xbf16, #tpu.memory_space<vmem>>, vector<1x8x8xbf16>
    %105 = vector.shape_cast %104 : vector<1x8x8xbf16> to vector<8x8xbf16>
    %cst_82 = arith.constant dense<0.000000e+00> : vector<8x8xf32>
    %106 = tpu.matmul %103, %105, %cst_82 {dimension_numbers = #tpu.dot_dimension_numbers<[1], [0], [0], [1], [0, 0, 1, 1], [], []>} : vector<8x8xbf16>, vector<8x8xbf16>, vector<8x8xf32> -> vector<8x8xf32>
    %c0_83 = arith.constant 0 : index
    %c0_84 = arith.constant 0 : index
    %107 = vector.load %arg17[%c0_83, %c0_84] : memref<8x32xf32, #tpu.memory_space<vmem>>, vector<8x32xf32>
    %108 = arith.truncf %106 : vector<8x8xf32> to vector<8x8xbf16>
    %c2_85 = arith.constant 2 : index
    %c0_86 = arith.constant 0 : index
    %c0_87 = arith.constant 0 : index
    %109 = vector.load %arg11[%c2_85, %c0_86, %c0_87] : memref<4x8x32xbf16, #tpu.memory_space<vmem>>, vector<1x8x32xbf16>
    %110 = vector.shape_cast %109 : vector<1x8x32xbf16> to vector<8x32xbf16>
    %cst_88 = arith.constant dense<0.000000e+00> : vector<8x32xf32>
    %111 = tpu.matmul %108, %110, %cst_88 {dimension_numbers = #tpu.dot_dimension_numbers<[1], [0], [0], [1], [0, 0, 1, 1], [], []>} : vector<8x8xbf16>, vector<8x32xbf16>, vector<8x32xf32> -> vector<8x32xf32>
    %112 = arith.addf %107, %111 : vector<8x32xf32>
    %c0_89 = arith.constant 0 : index
    %c0_90 = arith.constant 0 : index
    %113 = vector.load %arg17[%c0_89, %c0_90] : memref<8x32xf32, #tpu.memory_space<vmem>>, vector<8x32xf32>
    tpu.vector_store %arg17[%c0_89, %c0_90], %112 {strides = array<i32>} : memref<8x32xf32, #tpu.memory_space<vmem>>, vector<8x32xf32>,
    %c3 = arith.constant 3 : index
    %c0_91 = arith.constant 0 : index
    %c0_92 = arith.constant 0 : index
    %114 = vector.load %arg5[%c3, %c0_91, %c0_92] : memref<4x32x8xbf16, #tpu.memory_space<vmem>>, vector<1x32x8xbf16>
    %115 = vector.shape_cast %114 : vector<1x32x8xbf16> to vector<32x8xbf16>
    %cst_93 = arith.constant dense<0.000000e+00> : vector<8x8xf32>
    %116 = tpu.matmul %4, %115, %cst_93 {dimension_numbers = #tpu.dot_dimension_numbers<[1], [0], [0], [1], [0, 0, 1, 1], [], []>} : vector<8x32xbf16>, vector<32x8xbf16>, vector<8x8xf32> -> vector<8x8xf32>
    %c3_94 = arith.constant 3 : index
    %c0_95 = arith.constant 0 : index
    %c0_96 = arith.constant 0 : index
    %117 = vector.load %arg6[%c3_94, %c0_95, %c0_96] : memref<4x1x8xf32, #tpu.memory_space<vmem>>, vector<1x1x8xf32>
    %118 = vector.shape_cast %117 : vector<1x1x8xf32> to vector<1x8xf32>
    %119 = vector.broadcast %118 : vector<1x8xf32> to vector<8x8xf32>
    %120 = arith.addf %116, %119 : vector<8x8xf32>
    %121 = arith.truncf %120 : vector<8x8xf32> to vector<8x8xbf16>
    %c3_97 = arith.constant 3 : index
    %c0_98 = arith.constant 0 : index
    %c0_99 = arith.constant 0 : index
    %122 = vector.load %arg15[%c3_97, %c0_98, %c0_99] : memref<4x8x8xbf16, #tpu.memory_space<vmem>>, vector<1x8x8xbf16>
    %123 = vector.shape_cast %122 : vector<1x8x8xbf16> to vector<8x8xbf16>
    %cst_100 = arith.constant dense<0.000000e+00> : vector<8x8xf32>
    %124 = tpu.matmul %121, %123, %cst_100 {dimension_numbers = #tpu.dot_dimension_numbers<[1], [0], [0], [1], [0, 0, 1, 1], [], []>} : vector<8x8xbf16>, vector<8x8xbf16>, vector<8x8xf32> -> vector<8x8xf32>
    %cst_101 = arith.constant dense<0xFF800000> : vector<8xf32>
    %125 = vector.multi_reduction <maximumf>, %124, %cst_101 [1] : vector<8x8xf32> to vector<8xf32>
    %126 = vector.shape_cast %125 : vector<8xf32> to vector<8x1xf32>
    %127 = vector.broadcast %126 : vector<8x1xf32> to vector<8x8xf32>
    %128 = arith.subf %124, %127 : vector<8x8xf32>
    %129 = math.exp %128 : vector<8x8xf32>
    %cst_102 = arith.constant dense<0.000000e+00> : vector<8xf32>
    %130 = vector.multi_reduction <add>, %129, %cst_102 [1] : vector<8x8xf32> to vector<8xf32>
    %131 = vector.shape_cast %130 : vector<8xf32> to vector<8x1xf32>
    %132 = tpu.reciprocal %131 : vector<8x1xf32> -> vector<8x1xf32>
    %133 = vector.broadcast %132 : vector<8x1xf32> to vector<8x8xf32>
    %134 = arith.mulf %129, %133 : vector<8x8xf32>
    %c0_103 = arith.constant 0 : index
    %c3_104 = arith.constant 3 : index
    %c0_105 = arith.constant 0 : index
    %c0_106 = arith.constant 0 : index
    %135 = vector.load %arg14[%c0_103, %c3_104, %c0_105, %c0_106] : memref<1x4x8x8xf32, #tpu.memory_space<vmem>>, vector<1x1x8x8xf32>
    %136 = vector.shape_cast %135 : vector<1x1x8x8xf32> to vector<8x8xf32>
    %137 = vector.shape_cast %134 : vector<8x8xf32> to vector<1x1x8x8xf32>
    tpu.vector_store %arg14[%c0_103, %c3_104, %c0_105, %c0_106], %137 {strides = array<i32>} : memref<1x4x8x8xf32, #tpu.memory_space<vmem>>, vector<1x1x8x8xf32>,
    %138 = arith.truncf %134 : vector<8x8xf32> to vector<8x8xbf16>
    %c3_107 = arith.constant 3 : index
    %c0_108 = arith.constant 0 : index
    %c0_109 = arith.constant 0 : index
    %139 = vector.load %arg16[%c3_107, %c0_108, %c0_109] : memref<4x8x8xbf16, #tpu.memory_space<vmem>>, vector<1x8x8xbf16>
    %140 = vector.shape_cast %139 : vector<1x8x8xbf16> to vector<8x8xbf16>
    %cst_110 = arith.constant dense<0.000000e+00> : vector<8x8xf32>
    %141 = tpu.matmul %138, %140, %cst_110 {dimension_numbers = #tpu.dot_dimension_numbers<[1], [0], [0], [1], [0, 0, 1, 1], [], []>} : vector<8x8xbf16>, vector<8x8xbf16>, vector<8x8xf32> -> vector<8x8xf32>
    %c0_111 = arith.constant 0 : index
    %c0_112 = arith.constant 0 : index
    %142 = vector.load %arg17[%c0_111, %c0_112] : memref<8x32xf32, #tpu.memory_space<vmem>>, vector<8x32xf32>
    %143 = arith.truncf %141 : vector<8x8xf32> to vector<8x8xbf16>
    %c3_113 = arith.constant 3 : index
    %c0_114 = arith.constant 0 : index
    %c0_115 = arith.constant 0 : index
    %144 = vector.load %arg11[%c3_113, %c0_114, %c0_115] : memref<4x8x32xbf16, #tpu.memory_space<vmem>>, vector<1x8x32xbf16>
    %145 = vector.shape_cast %144 : vector<1x8x32xbf16> to vector<8x32xbf16>
    %cst_116 = arith.constant dense<0.000000e+00> : vector<8x32xf32>
    %146 = tpu.matmul %143, %145, %cst_116 {dimension_numbers = #tpu.dot_dimension_numbers<[1], [0], [0], [1], [0, 0, 1, 1], [], []>} : vector<8x8xbf16>, vector<8x32xbf16>, vector<8x32xf32> -> vector<8x32xf32>
    %147 = arith.addf %142, %146 : vector<8x32xf32>
    %c0_117 = arith.constant 0 : index
    %c0_118 = arith.constant 0 : index
    %148 = vector.load %arg17[%c0_117, %c0_118] : memref<8x32xf32, #tpu.memory_space<vmem>>, vector<8x32xf32>
    tpu.vector_store %arg17[%c0_117, %c0_118], %147 {strides = array<i32>} : memref<8x32xf32, #tpu.memory_space<vmem>>, vector<8x32xf32>,
    %c0_119 = arith.constant 0 : index
    %c0_120 = arith.constant 0 : index
    %149 = vector.load %arg17[%c0_119, %c0_120] : memref<8x32xf32, #tpu.memory_space<vmem>>, vector<8x32xf32>
    %c0_121 = arith.constant 0 : index
    %c0_122 = arith.constant 0 : index
    %c0_123 = arith.constant 0 : index
    %150 = vector.load %arg13[%c0_121, %c0_122, %c0_123] : memref<1x8x32xf32, #tpu.memory_space<vmem>>, vector<1x8x32xf32>
    %151 = vector.shape_cast %150 : vector<1x8x32xf32> to vector<8x32xf32>
    %152 = vector.shape_cast %149 : vector<8x32xf32> to vector<1x8x32xf32>
    tpu.vector_store %arg13[%c0_121, %c0_122, %c0_123], %152 {strides = array<i32>} : memref<1x8x32xf32, #tpu.memory_space<vmem>>, vector<1x8x32xf32>,
    return
  }
  func.func @transform_0(%arg0: i32, %arg1: i32) -> (i32, i32, i32) {
    %c0_i32 = arith.constant 0 : i32
    %c0_i32_0 = arith.constant 0 : i32
    return %arg0, %arg1, %c0_i32 : i32, i32, i32
  }
  func.func @transform_1(%arg0: i32, %arg1: i32) -> (i32, i32, i32) {
    %c0_i32 = arith.constant 0 : i32
    %c0_i32_0 = arith.constant 0 : i32
    %c0_i32_1 = arith.constant 0 : i32
    return %arg0, %c0_i32, %c0_i32_0 : i32, i32, i32
  }
  func.func @transform_2(%arg0: i32, %arg1: i32) -> (i32, i32, i32) {
    %c0_i32 = arith.constant 0 : i32
    %c0_i32_0 = arith.constant 0 : i32
    %c0_i32_1 = arith.constant 0 : i32
    return %arg0, %c0_i32, %c0_i32_0 : i32, i32, i32
  }
  func.func @transform_3(%arg0: i32, %arg1: i32) -> (i32, i32, i32) {
    %c0_i32 = arith.constant 0 : i32
    %c0_i32_0 = arith.constant 0 : i32
    %c0_i32_1 = arith.constant 0 : i32
    %c0_i32_2 = arith.constant 0 : i32
    return %c0_i32, %c0_i32_0, %c0_i32_1 : i32, i32, i32
  }
  func.func @transform_4(%arg0: i32, %arg1: i32) -> (i32, i32, i32) {
    %c0_i32 = arith.constant 0 : i32
    %c0_i32_0 = arith.constant 0 : i32
    %c0_i32_1 = arith.constant 0 : i32
    %c0_i32_2 = arith.constant 0 : i32
    return %c0_i32, %c0_i32_0, %c0_i32_1 : i32, i32, i32
  }
  func.func @transform_5(%arg0: i32, %arg1: i32) -> (i32, i32, i32) {
    %c0_i32 = arith.constant 0 : i32
    %c0_i32_0 = arith.constant 0 : i32
    %c0_i32_1 = arith.constant 0 : i32
    %c0_i32_2 = arith.constant 0 : i32
    return %c0_i32, %c0_i32_0, %c0_i32_1 : i32, i32, i32
  }
  func.func @transform_6(%arg0: i32, %arg1: i32) -> (i32, i32, i32) {
    %c0_i32 = arith.constant 0 : i32
    %c0_i32_0 = arith.constant 0 : i32
    %c0_i32_1 = arith.constant 0 : i32
    %c0_i32_2 = arith.constant 0 : i32
    return %c0_i32, %c0_i32_0, %c0_i32_1 : i32, i32, i32
  }
  func.func @transform_7(%arg0: i32, %arg1: i32) -> (i32, i32, i32) {
    %c0_i32 = arith.constant 0 : i32
    %c0_i32_0 = arith.constant 0 : i32
    %c0_i32_1 = arith.constant 0 : i32
    %c0_i32_2 = arith.constant 0 : i32
    return %c0_i32, %c0_i32_0, %c0_i32_1 : i32, i32, i32
  }
  func.func @transform_8(%arg0: i32, %arg1: i32) -> (i32, i32, i32) {
    %c0_i32 = arith.constant 0 : i32
    %c0_i32_0 = arith.constant 0 : i32
    %c0_i32_1 = arith.constant 0 : i32
    %c0_i32_2 = arith.constant 0 : i32
    return %c0_i32, %c0_i32_0, %c0_i32_1 : i32, i32, i32
  }
  func.func @transform_9(%arg0: i32, %arg1: i32) -> (i32, i32, i32) {
    %c0_i32 = arith.constant 0 : i32
    %c0_i32_0 = arith.constant 0 : i32
    %c0_i32_1 = arith.constant 0 : i32
    %c0_i32_2 = arith.constant 0 : i32
    return %c0_i32, %c0_i32_0, %c0_i32_1 : i32, i32, i32
  }
  func.func @transform_10(%arg0: i32, %arg1: i32) -> (i32, i32) {
    %c0_i32 = arith.constant 0 : i32
    %c0_i32_0 = arith.constant 0 : i32
    %c0_i32_1 = arith.constant 0 : i32
    return %c0_i32, %c0_i32_0 : i32, i32
  }
  func.func @transform_11(%arg0: i32, %arg1: i32) -> (i32, i32, i32) {
    %c0_i32 = arith.constant 0 : i32
    %c0_i32_0 = arith.constant 0 : i32
    return %arg0, %arg1, %c0_i32 : i32, i32, i32
  }
  func.func @transform_12(%arg0: i32, %arg1: i32) -> (i32, i32, i32, i32) {
    %c0_i32 = arith.constant 0 : i32
    %c0_i32_0 = arith.constant 0 : i32
    %c0_i32_1 = arith.constant 0 : i32
    return %arg0, %c0_i32, %arg1, %c0_i32_0 : i32, i32, i32, i32
  }
}

</mosaic_0001>

<llo_original>
// kernel: tpu_custom_call.1
$region0: #{tpu_custom_call.1}
  #allocation0 [shape = 'u32[]', space=smem, size = 0x4, offset = 0x4, fixed_abs, tag = 'smem constant byte address 0x4 - core index']
  #allocation1 [shape = 'u32[144,128]{1,0:T(1,128)}', space=vmem, size = 0x12000, scoped, tag = 'internal scratch']
  #allocation2 [shape = 'bf16[4,8,8]{2,1,0:T(8,128)(2,1)}', space=vmem, size = 0x2000, scoped, tag = 'scratch operand']
  #allocation3 [shape = 'bf16[4,8,8]{2,1,0:T(8,128)(2,1)}', space=vmem, size = 0x2000, scoped, tag = 'scratch operand']
  #allocation4 [shape = 'f32[8,32]{1,0:T(8,128)}', space=vmem, size = 0x1000, scoped, tag = 'scratch operand']
  %s0 = inlined_call_operand.vmem [shape: bf16[2,8,32], index: 0, kind: input, shape index: {}]
  %s1 = inlined_call_operand.vmem [shape: bf16[2,32,8], index: 1, kind: input, shape index: {}]
  %s2 = inlined_call_operand.vmem [shape: bf16[2,8,32], index: 2, kind: input, shape index: {}]
  %s3 = inlined_call_operand.vmem [shape: bf16[4,32,8], index: 3, kind: input, shape index: {}]
  %s4 = inlined_call_operand.vmem [shape: f32[4,1,8], index: 4, kind: input, shape index: {}]
  %s5 = inlined_call_operand.vmem [shape: bf16[4,8,32], index: 5, kind: input, shape index: {}]
  %s6 = inlined_call_operand.vmem [shape: f32[4,8,1], index: 6, kind: input, shape index: {}]
  %s7 = inlined_call_operand.vmem [shape: bf16[4,32,8], index: 7, kind: input, shape index: {}]
  %s8 = inlined_call_operand.vmem [shape: f32[4,1,8], index: 8, kind: input, shape index: {}]
  %s9 = inlined_call_operand.vmem [shape: bf16[4,8,32], index: 9, kind: input, shape index: {}]
  %s10 = inlined_call_operand.vmem [shape: f32[1,32], index: 10, kind: input, shape index: {}]
  %s11 = inlined_call_operand.hbm [shape: f32[2,8,32], index: 11, kind: output, shape index: {0}]
  %s12 = inlined_call_operand.hbm [shape: f32[2,4,8,8], index: 12, kind: output, shape index: {1}]
  %13 = xla_tuple %s11, %s12
  %s14 = sld [smem:[#allocation0]]
  $region89: #{tpu_custom_call.1} parent=0
    _
  %s16 = ssub.s32 1, %s14
  %s17 = scalar_select 0, %s16, %s14
  $region1: #{tpu_custom_call.1} parent=0
    #allocation5 [shape = 'u8[8192]{0}', space=vmem, size = 0x2000, scoped, tag = 'output window, operand 0']
    #allocation6 [shape = 's32[2]{0}', space=sflag, size = 0x8, scoped, tag = 'scoped memory for tpu_custom_call.1']
    #allocation7 [shape = 'u8[32768]{0}', space=vmem, size = 0x8000, scoped, tag = 'output window, operand 1']
    #allocation8 [shape = 's32[2]{0}', space=sflag, size = 0x8, scoped, tag = 'scoped memory for tpu_custom_call.1']
    %18 = vsyncpa [#allocation6], 0
    %s19 = scalar_lea.sflag [#allocation6], 1
    %20 = vsyncpa %s19, 0
    %21 = vsyncpa [#allocation8], 0
    %s22 = scalar_lea.sflag [#allocation8], 1
    %23 = vsyncpa %s22, 0
    loop: start=0, step=1, limit=4
    $region2: #{tpu_custom_call.1} parent=1 // loop_pre_header
      _
    $region3: #{tpu_custom_call.1} parent=1 // loop_header
      %s25 = sphi 0, %s29
      %p26 = scmp.ge.s32.totalorder %s25, 4
      %s32 = sphi 0, %s44
      %s33 = sphi 0, %s40
      %s34 = sphi 0, %s32
      %s35 = sphi 0, %s33
      %s36 = sphi 0, %s34
      %s37 = sphi 0, %s35
      %s49 = sphi 0, %s51
      %s52 = sphi 0, %s49
      %s53 = sphi 0, %s52
      %s69 = sphi 0, %s53
      %s75 = sphi 0, %s77
      %s78 = sphi 0, %s75
      %s79 = sphi 0, %s78
      %s95 = sphi 0, %s79
      %s101 = sphi 0, %s103
      %s104 = sphi 0, %s101
      %s105 = sphi 0, %s104
      %s121 = sphi 0, %s105
      %s125 = sphi 0, %s125
      %s127 = sphi 0, %s125
      %s128 = sphi 0, %s127
      %s142 = sphi 0, %s128
      %s146 = sphi 0, %s146
      %s148 = sphi 0, %s146
      %s149 = sphi 0, %s148
      %s163 = sphi 0, %s149
      %s167 = sphi 0, %s167
      %s169 = sphi 0, %s167
      %s170 = sphi 0, %s169
      %s184 = sphi 0, %s170
      %s188 = sphi 0, %s188
      %s190 = sphi 0, %s188
      %s191 = sphi 0, %s190
      %s205 = sphi 0, %s191
      %s209 = sphi 0, %s209
      %s211 = sphi 0, %s209
      %s212 = sphi 0, %s211
      %s226 = sphi 0, %s212
      %s230 = sphi 0, %s230
      %s232 = sphi 0, %s230
      %s233 = sphi 0, %s232
      %s247 = sphi 0, %s233
      %s251 = sphi 0, %s251
      %s253 = sphi 0, %s251
      %s254 = sphi 0, %s253
      %s268 = sphi 0, %s254
      %s272 = sphi 0, %s272
      %s274 = sphi 0, %s272
      %s275 = sphi 0, %s274
      %s289 = sphi 0, %s275
      %s297 = sphi 0, %s299
      %s300 = sphi 0, %s297
      %s301 = sphi 0, %s300
      %s317 = sphi 0, %s301
      %s325 = sphi 0, %s327
      %s328 = sphi 0, %s325
      %s329 = sphi 0, %s328
      %s345 = sphi 0, %s329
    $region4: #{tpu_custom_call.1} parent=1 // loop_header_branch
      %28 = sbr.rel (%p26) target = $region8
    $region5: #{tpu_custom_call.1} parent=1 // loop_body
      %s30 = ssub.s32 %s25, 1
      %s31 = ssub.s32 %s25, 2
      %s38 = sadd.s32 1, %s33
      %p39 = scmp.ge.s32.totalorder %s38, 1
      %s40 = scalar_select %p39, 0, %s38
      %s41 = sadd.s32 1, %s32
      %s42 = scalar_select %p39, %s41, %s32
      %p43 = scmp.ge.s32.totalorder %s42, 2
      %s44 = scalar_select %p43, 0, %s42
      %s45 = ssub.s32 %s32, %s44
      %s46 = ssub.s32 %s33, %s40
      %s47 = sor.u32 %s45, %s46
      %p48 = scmp.eq.s32.totalorder %s47, 0
      %s50 = sadd.s32 %s49, 1
      %s51 = scalar_select %p48, %s49, %s50
      %p54 = pneg %p48
      %p55 = scmp.eq.s32.totalorder %s25, 1
      %p56 = por %p54, %p55
      %p57 = scmp.ne.s32.totalorder %s49, %s52
      %p58 = scmp.eq.s32.totalorder %s25, 0
      %p59 = por %p57, %p58
      %p60 = scmp.ne.s32.totalorder %s49, %s52
      %p61 = scmp.eq.s32.totalorder %s30, 1
      %p62 = por %p60, %p61
      %p63 = scmp.ne.s32.totalorder %s52, %s53
      %p64 = scmp.eq.s32.totalorder %s30, 0
      %p65 = por %p63, %p64
      %p66 = scmp.ne.s32.totalorder %s52, %s53
      %p67 = scmp.eq.s32.totalorder %s31, 1
      %p68 = por %p66, %p67
      %p70 = scmp.ne.s32.totalorder %s53, %s69
      %p71 = scmp.eq.s32.totalorder %s31, 0
      %p72 = por %p70, %p71
      %s73 = ssub.s32 %s32, %s44
      %p74 = scmp.eq.s32.totalorder %s73, 0
      %s76 = sadd.s32 %s75, 1
      %s77 = scalar_select %p74, %s75, %s76
      %p80 = pneg %p74
      %p81 = scmp.eq.s32.totalorder %s25, 1
      %p82 = por %p80, %p81
      %p83 = scmp.ne.s32.totalorder %s75, %s78
      %p84 = scmp.eq.s32.totalorder %s25, 0
      %p85 = por %p83, %p84
      %p86 = scmp.ne.s32.totalorder %s75, %s78
      %p87 = scmp.eq.s32.totalorder %s30, 1
      %p88 = por %p86, %p87
      %p89 = scmp.ne.s32.totalorder %s78, %s79
      %p90 = scmp.eq.s32.totalorder %s30, 0
      %p91 = por %p89, %p90
      %p92 = scmp.ne.s32.totalorder %s78, %s79
      %p93 = scmp.eq.s32.totalorder %s31, 1
      %p94 = por %p92, %p93
      %p96 = scmp.ne.s32.totalorder %s79, %s95
      %p97 = scmp.eq.s32.totalorder %s31, 0
      %p98 = por %p96, %p97
      %s99 = ssub.s32 %s32, %s44
      %p100 = scmp.eq.s32.totalorder %s99, 0
      %s102 = sadd.s32 %s101, 1
      %s103 = scalar_select %p100, %s101, %s102
      %p106 = pneg %p100
      %p107 = scmp.eq.s32.totalorder %s25, 1
      %p108 = por %p106, %p107
      %p109 = scmp.ne.s32.totalorder %s101, %s104
      %p110 = scmp.eq.s32.totalorder %s25, 0
      %p111 = por %p109, %p110
      %p112 = scmp.ne.s32.totalorder %s101, %s104
      %p113 = scmp.eq.s32.totalorder %s30, 1
      %p114 = por %p112, %p113
      %p115 = scmp.ne.s32.totalorder %s104, %s105
      %p116 = scmp.eq.s32.totalorder %s30, 0
      %p117 = por %p115, %p116
      %p118 = scmp.ne.s32.totalorder %s104, %s105
      %p119 = scmp.eq.s32.totalorder %s31, 1
      %p120 = por %p118, %p119
      %p122 = scmp.ne.s32.totalorder %s105, %s121
      %p123 = scmp.eq.s32.totalorder %s31, 0
      %p124 = por %p122, %p123
      %s126 = sadd.s32 %s125, 1
      %p129 = scmp.eq.s32.totalorder %s25, 1
      %p130 = scmp.ne.s32.totalorder %s125, %s127
      %p131 = scmp.eq.s32.totalorder %s25, 0
      %p132 = por %p130, %p131
      %p133 = scmp.ne.s32.totalorder %s125, %s127
      %p134 = scmp.eq.s32.totalorder %s30, 1
      %p135 = por %p133, %p134
      %p136 = scmp.ne.s32.totalorder %s127, %s128
      %p137 = scmp.eq.s32.totalorder %s30, 0
      %p138 = por %p136, %p137
      %p139 = scmp.ne.s32.totalorder %s127, %s128
      %p140 = scmp.eq.s32.totalorder %s31, 1
      %p141 = por %p139, %p140
      %p143 = scmp.ne.s32.totalorder %s128, %s142
      %p144 = scmp.eq.s32.totalorder %s31, 0
      %p145 = por %p143, %p144
      %s147 = sadd.s32 %s146, 1
      %p150 = scmp.eq.s32.totalorder %s25, 1
      %p151 = scmp.ne.s32.totalorder %s146, %s148
      %p152 = scmp.eq.s32.totalorder %s25, 0
      %p153 = por %p151, %p152
      %p154 = scmp.ne.s32.totalorder %s146, %s148
      %p155 = scmp.eq.s32.totalorder %s30, 1
      %p156 = por %p154, %p155
      %p157 = scmp.ne.s32.totalorder %s148, %s149
      %p158 = scmp.eq.s32.totalorder %s30, 0
      %p159 = por %p157, %p158
      %p160 = scmp.ne.s32.totalorder %s148, %s149
      %p161 = scmp.eq.s32.totalorder %s31, 1
      %p162 = por %p160, %p161
      %p164 = scmp.ne.s32.totalorder %s149, %s163
      %p165 = scmp.eq.s32.totalorder %s31, 0
      %p166 = por %p164, %p165
      %s168 = sadd.s32 %s167, 1
      %p171 = scmp.eq.s32.totalorder %s25, 1
      %p172 = scmp.ne.s32.totalorder %s167, %s169
      %p173 = scmp.eq.s32.totalorder %s25, 0
      %p174 = por %p172, %p173
      %p175 = scmp.ne.s32.totalorder %s167, %s169
      %p176 = scmp.eq.s32.totalorder %s30, 1
      %p177 = por %p175, %p176
      %p178 = scmp.ne.s32.totalorder %s169, %s170
      %p179 = scmp.eq.s32.totalorder %s30, 0
      %p180 = por %p178, %p179
      %p181 = scmp.ne.s32.totalorder %s169, %s170
      %p182 = scmp.eq.s32.totalorder %s31, 1
      %p183 = por %p181, %p182
      %p185 = scmp.ne.s32.totalorder %s170, %s184
      %p186 = scmp.eq.s32.totalorder %s31, 0
      %p187 = por %p185, %p186
      %s189 = sadd.s32 %s188, 1
      %p192 = scmp.eq.s32.totalorder %s25, 1
      %p193 = scmp.ne.s32.totalorder %s188, %s190
      %p194 = scmp.eq.s32.totalorder %s25, 0
      %p195 = por %p193, %p194
      %p196 = scmp.ne.s32.totalorder %s188, %s190
      %p197 = scmp.eq.s32.totalorder %s30, 1
      %p198 = por %p196, %p197
      %p199 = scmp.ne.s32.totalorder %s190, %s191
      %p200 = scmp.eq.s32.totalorder %s30, 0
      %p201 = por %p199, %p200
      %p202 = scmp.ne.s32.totalorder %s190, %s191
      %p203 = scmp.eq.s32.totalorder %s31, 1
      %p204 = por %p202, %p203
      %p206 = scmp.ne.s32.totalorder %s191, %s205
      %p207 = scmp.eq.s32.totalorder %s31, 0
      %p208 = por %p206, %p207
      %s210 = sadd.s32 %s209, 1
      %p213 = scmp.eq.s32.totalorder %s25, 1
      %p214 = scmp.ne.s32.totalorder %s209, %s211
      %p215 = scmp.eq.s32.totalorder %s25, 0
      %p216 = por %p214, %p215
      %p217 = scmp.ne.s32.totalorder %s209, %s211
      %p218 = scmp.eq.s32.totalorder %s30, 1
      %p219 = por %p217, %p218
      %p220 = scmp.ne.s32.totalorder %s211, %s212
      %p221 = scmp.eq.s32.totalorder %s30, 0
      %p222 = por %p220, %p221
      %p223 = scmp.ne.s32.totalorder %s211, %s212
      %p224 = scmp.eq.s32.totalorder %s31, 1
      %p225 = por %p223, %p224
      %p227 = scmp.ne.s32.totalorder %s212, %s226
      %p228 = scmp.eq.s32.totalorder %s31, 0
      %p229 = por %p227, %p228
      %s231 = sadd.s32 %s230, 1
      %p234 = scmp.eq.s32.totalorder %s25, 1
      %p235 = scmp.ne.s32.totalorder %s230, %s232
      %p236 = scmp.eq.s32.totalorder %s25, 0
      %p237 = por %p235, %p236
      %p238 = scmp.ne.s32.totalorder %s230, %s232
      %p239 = scmp.eq.s32.totalorder %s30, 1
      %p240 = por %p238, %p239
      %p241 = scmp.ne.s32.totalorder %s232, %s233
      %p242 = scmp.eq.s32.totalorder %s30, 0
      %p243 = por %p241, %p242
      %p244 = scmp.ne.s32.totalorder %s232, %s233
      %p245 = scmp.eq.s32.totalorder %s31, 1
      %p246 = por %p244, %p245
      %p248 = scmp.ne.s32.totalorder %s233, %s247
      %p249 = scmp.eq.s32.totalorder %s31, 0
      %p250 = por %p248, %p249
      %s252 = sadd.s32 %s251, 1
      %p255 = scmp.eq.s32.totalorder %s25, 1
      %p256 = scmp.ne.s32.totalorder %s251, %s253
      %p257 = scmp.eq.s32.totalorder %s25, 0
      %p258 = por %p256, %p257
      %p259 = scmp.ne.s32.totalorder %s251, %s253
      %p260 = scmp.eq.s32.totalorder %s30, 1
      %p261 = por %p259, %p260
      %p262 = scmp.ne.s32.totalorder %s253, %s254
      %p263 = scmp.eq.s32.totalorder %s30, 0
      %p264 = por %p262, %p263
      %p265 = scmp.ne.s32.totalorder %s253, %s254
      %p266 = scmp.eq.s32.totalorder %s31, 1
      %p267 = por %p265, %p266
      %p269 = scmp.ne.s32.totalorder %s254, %s268
      %p270 = scmp.eq.s32.totalorder %s31, 0
      %p271 = por %p269, %p270
      %s273 = sadd.s32 %s272, 1
      %p276 = scmp.eq.s32.totalorder %s25, 1
      %p277 = scmp.ne.s32.totalorder %s272, %s274
      %p278 = scmp.eq.s32.totalorder %s25, 0
      %p279 = por %p277, %p278
      %p280 = scmp.ne.s32.totalorder %s272, %s274
      %p281 = scmp.eq.s32.totalorder %s30, 1
      %p282 = por %p280, %p281
      %p283 = scmp.ne.s32.totalorder %s274, %s275
      %p284 = scmp.eq.s32.totalorder %s30, 0
      %p285 = por %p283, %p284
      %p286 = scmp.ne.s32.totalorder %s274, %s275
      %p287 = scmp.eq.s32.totalorder %s31, 1
      %p288 = por %p286, %p287
      %p290 = scmp.ne.s32.totalorder %s275, %s289
      %p291 = scmp.eq.s32.totalorder %s31, 0
      %p292 = por %p290, %p291
      %s293 = ssub.s32 %s32, %s44
      %s294 = ssub.s32 %s33, %s40
      %s295 = sor.u32 %s293, %s294
      %p296 = scmp.eq.s32.totalorder %s295, 0
      %s298 = sadd.s32 %s297, 1
      %s299 = scalar_select %p296, %s297, %s298
      %p302 = pneg %p296
      %p303 = scmp.eq.s32.totalorder %s25, 1
      %p304 = por %p302, %p303
      %p305 = scmp.ne.s32.totalorder %s297, %s300
      %p306 = scmp.eq.s32.totalorder %s25, 0
      %p307 = por %p305, %p306
      %p308 = scmp.ne.s32.totalorder %s297, %s300
      %p309 = scmp.eq.s32.totalorder %s30, 1
      %p310 = por %p308, %p309
      %p311 = scmp.ne.s32.totalorder %s300, %s301
      %p312 = scmp.eq.s32.totalorder %s30, 0
      %p313 = por %p311, %p312
      %p314 = scmp.ne.s32.totalorder %s300, %s301
      %p315 = scmp.eq.s32.totalorder %s31, 1
      %p316 = por %p314, %p315
      %p318 = scmp.ne.s32.totalorder %s301, %s317
      %p319 = scmp.eq.s32.totalorder %s31, 0
      %p320 = por %p318, %p319
      %s321 = ssub.s32 %s32, %s44
      %s322 = ssub.s32 %s33, %s40
      %s323 = sor.u32 %s321, %s322
      %p324 = scmp.eq.s32.totalorder %s323, 0
      %s326 = sadd.s32 %s325, 1
      %s327 = scalar_select %p324, %s325, %s326
      %p330 = pneg %p324
      %p331 = scmp.eq.s32.totalorder %s25, 1
      %p332 = por %p330, %p331
      %p333 = scmp.ne.s32.totalorder %s325, %s328
      %p334 = scmp.eq.s32.totalorder %s25, 0
      %p335 = por %p333, %p334
      %p336 = scmp.ne.s32.totalorder %s325, %s328
      %p337 = scmp.eq.s32.totalorder %s30, 1
      %p338 = por %p336, %p337
      %p339 = scmp.ne.s32.totalorder %s328, %s329
      %p340 = scmp.eq.s32.totalorder %s30, 0
      %p341 = por %p339, %p340
      %p342 = scmp.ne.s32.totalorder %s328, %s329
      %p343 = scmp.eq.s32.totalorder %s31, 1
      %p344 = por %p342, %p343
      %p346 = scmp.ne.s32.totalorder %s329, %s345
      %p347 = scmp.eq.s32.totalorder %s31, 0
      %p348 = por %p346, %p347
      %p349 = scmp.le.s32.totalorder 1, %s25
      %p350 = scmp.lt.s32.totalorder %s25, 3
      %p351 = pnand %p349, %p350
      %p352 = pneg %p351
      // Predicated region
      $region9: #{tpu_custom_call.1} parent=5 // pred_check
        _
      $region10: #{tpu_custom_call.1} parent=5 // pred_check_branch
        %354 = sbr.rel (%p351) target = $region12
      $region11: #{tpu_custom_call.1} parent=5 // pred_region
        %s355 = ssub.s32 %s25, 1
        // Predicated region
        $region13: #{tpu_custom_call.1} parent=11 // pred_check
          %p356 = pneg %p138
        $region14: #{tpu_custom_call.1} parent=11 // pred_check_branch
          %358 = sbr.rel (%p356) target = $region16
        $region15: #{tpu_custom_call.1} parent=11 // pred_region
          _
        $region16: #{tpu_custom_call.1} parent=11 // pred_fallthru
          _
        // Predicated region
        $region17: #{tpu_custom_call.1} parent=11 // pred_check
          %p359 = pneg %p159
        $region18: #{tpu_custom_call.1} parent=11 // pred_check_branch
          %361 = sbr.rel (%p359) target = $region20
        $region19: #{tpu_custom_call.1} parent=11 // pred_region
          _
        $region20: #{tpu_custom_call.1} parent=11 // pred_fallthru
          _
        // Predicated region
        $region21: #{tpu_custom_call.1} parent=11 // pred_check
          %p362 = pneg %p180
        $region22: #{tpu_custom_call.1} parent=11 // pred_check_branch
          %364 = sbr.rel (%p362) target = $region24
        $region23: #{tpu_custom_call.1} parent=11 // pred_region
          _
        $region24: #{tpu_custom_call.1} parent=11 // pred_fallthru
          _
        // Predicated region
        $region25: #{tpu_custom_call.1} parent=11 // pred_check
          %p365 = pneg %p201
        $region26: #{tpu_custom_call.1} parent=11 // pred_check_branch
          %367 = sbr.rel (%p365) target = $region28
        $region27: #{tpu_custom_call.1} parent=11 // pred_region
          _
        $region28: #{tpu_custom_call.1} parent=11 // pred_fallthru
          _
        // Predicated region
        $region29: #{tpu_custom_call.1} parent=11 // pred_check
          %p368 = pneg %p222
        $region30: #{tpu_custom_call.1} parent=11 // pred_check_branch
          %370 = sbr.rel (%p368) target = $region32
        $region31: #{tpu_custom_call.1} parent=11 // pred_region
          _
        $region32: #{tpu_custom_call.1} parent=11 // pred_fallthru
          _
        // Predicated region
        $region33: #{tpu_custom_call.1} parent=11 // pred_check
          %p371 = pneg %p243
        $region34: #{tpu_custom_call.1} parent=11 // pred_check_branch
          %373 = sbr.rel (%p371) target = $region36
        $region35: #{tpu_custom_call.1} parent=11 // pred_region
          _
        $region36: #{tpu_custom_call.1} parent=11 // pred_fallthru
          _
        // Predicated region
        $region37: #{tpu_custom_call.1} parent=11 // pred_check
          %p374 = pneg %p264
        $region38: #{tpu_custom_call.1} parent=11 // pred_check_branch
          %376 = sbr.rel (%p374) target = $region40
        $region39: #{tpu_custom_call.1} parent=11 // pred_region
          _
        $region40: #{tpu_custom_call.1} parent=11 // pred_fallthru
          _
        // Predicated region
        $region41: #{tpu_custom_call.1} parent=11 // pred_check
          %p377 = pneg %p285
        $region42: #{tpu_custom_call.1} parent=11 // pred_check_branch
          %379 = sbr.rel (%p377) target = $region44
        $region43: #{tpu_custom_call.1} parent=11 // pred_region
          _
        $region44: #{tpu_custom_call.1} parent=11 // pred_fallthru
          _
      $region12: #{tpu_custom_call.1} parent=5 // pred_fallthru
        _
      %p380 = scmp.lt.s32.totalorder %s25, 2
      // Predicated region
      $region45: #{tpu_custom_call.1} parent=5 // pred_check
        %p381 = pneg %p380
      $region46: #{tpu_custom_call.1} parent=5 // pred_check_branch
        %383 = sbr.rel (%p381) target = $region48
      $region47: #{tpu_custom_call.1} parent=5 // pred_region
        // Predicated region
        $region49: #{tpu_custom_call.1} parent=47 // pred_check
          %p384 = pneg %p59
        $region50: #{tpu_custom_call.1} parent=47 // pred_check_branch
          %386 = sbr.rel (%p384) target = $region52
        $region51: #{tpu_custom_call.1} parent=47 // pred_region
          %p387 = scmp.lt.s32.totalorder %s32, 1
          %s388 = scalar_select %p387, %s32, 1
          %p389 = scmp.lt.s32.totalorder %s33, 0
          %s390 = scalar_select %p389, %s33, 0
          %s391 = sadd.s32 %s390, %s388
          %s392 = smul.addr %s391, 4
          %s393 = scalar_lea.vmem %s0, %s392
        $region52: #{tpu_custom_call.1} parent=47 // pred_fallthru
          _
        // Predicated region
        $region53: #{tpu_custom_call.1} parent=47 // pred_check
          %p394 = pneg %p85
        $region54: #{tpu_custom_call.1} parent=47 // pred_check_branch
          %396 = sbr.rel (%p394) target = $region56
        $region55: #{tpu_custom_call.1} parent=47 // pred_region
          %p397 = scmp.lt.s32.totalorder %s32, 1
          %s398 = scalar_select %p397, %s32, 1
          %s399 = smul.addr %s398, 4
          %s400 = smul.addr %s399, 4
          %s401 = scalar_lea.vmem %s1, %s400
        $region56: #{tpu_custom_call.1} parent=47 // pred_fallthru
          _
        // Predicated region
        $region57: #{tpu_custom_call.1} parent=47 // pred_check
          %p402 = pneg %p111
        $region58: #{tpu_custom_call.1} parent=47 // pred_check_branch
          %404 = sbr.rel (%p402) target = $region60
        $region59: #{tpu_custom_call.1} parent=47 // pred_region
          %p405 = scmp.lt.s32.totalorder %s32, 1
          %s406 = scalar_select %p405, %s32, 1
          %s407 = smul.addr %s406, 4
          %s408 = scalar_lea.vmem %s2, %s407
        $region60: #{tpu_custom_call.1} parent=47 // pred_fallthru
          _
      $region48: #{tpu_custom_call.1} parent=5 // pred_fallthru
        _
      %p409 = scmp.le.s32.totalorder 1, %s25
      %p410 = scmp.lt.s32.totalorder %s25, 3
      %p411 = pnand %p409, %p410
      %p412 = pneg %p411
      // Predicated region
      $region61: #{tpu_custom_call.1} parent=5 // pred_check
        _
      $region62: #{tpu_custom_call.1} parent=5 // pred_check_branch
        %414 = sbr.rel (%p411) target = $region64
      $region63: #{tpu_custom_call.1} parent=5 // pred_region
        %s415 = ssub.s32 %s25, 1
        %p416 = scmp.lt.s32.totalorder %s34, 1
        %s417 = scalar_select %p416, %s34, 1
        %p418 = scmp.lt.s32.totalorder %s35, 0
        %s419 = scalar_select %p418, %s35, 0
        %s420 = sadd.s32 %s419, %s417
        %s421 = smul.addr %s420, 4
        %s422 = scalar_lea.vmem %s0, %s421
        %p423 = pneg %p65
        %p424 = pneg %p62
        %p425 = scmp.lt.s32.totalorder %s34, 1
        %s426 = scalar_select %p425, %s34, 1
        %s427 = smul.addr %s426, 4
        %s428 = smul.addr %s427, 4
        %s429 = scalar_lea.vmem %s1, %s428
        %p430 = pneg %p91
        %p431 = pneg %p88
        %p432 = scmp.lt.s32.totalorder %s34, 1
        %s433 = scalar_select %p432, %s34, 1
        %s434 = smul.addr %s433, 4
        %s435 = scalar_lea.vmem %s2, %s434
        %p436 = pneg %p117
        %p437 = pneg %p114
        %p438 = pneg %p138
        %p439 = pneg %p135
        %p440 = pneg %p159
        %p441 = pneg %p156
        %p442 = pneg %p180
        %p443 = pneg %p177
        %p444 = pneg %p201
        %p445 = pneg %p198
        %p446 = pneg %p222
        %p447 = pneg %p219
        %p448 = pneg %p243
        %p449 = pneg %p240
        %p450 = pneg %p264
        %p451 = pneg %p261
        %p452 = pneg %p285
        %p453 = pneg %p282
        %p454 = pneg %p313
        %p455 = pneg %p310
        %s456 = sand.u32 %s300, 1
        %s457 = scalar_lea.sflag [#allocation6], %s456
        %s458 = sand.u32 %s300, 1
        %s459 = smul.addr %s458, 8
        %s460 = scalar_lea.vmem [#allocation5], %s459
        %p461 = pneg %p341
        %p462 = pneg %p338
        %s463 = sand.u32 %s328, 1
        %s464 = scalar_lea.sflag [#allocation8], %s463
        %s465 = sand.u32 %s328, 1
        %s466 = smul.addr %s465, 32
        %s467 = scalar_lea.vmem [#allocation7], %s466
        %p468 = scmp.lt.s32.totalorder %s34, 1
        %s469 = scalar_select %p468, %s34, 1
        %p470 = scmp.lt.s32.totalorder %s35, 0
        %s471 = scalar_select %p470, %s35, 0
        %s472 = sadd.s32 %s471, %s469
        %s473 = smul.addr %s472, 4
        %s474 = scalar_lea.vmem %s0, %s473
        %p475 = scmp.lt.s32.totalorder %s34, 1
        %s476 = scalar_select %p475, %s34, 1
        %s477 = smul.addr %s476, 4
        %s478 = smul.addr %s477, 4
        %s479 = scalar_lea.vmem %s1, %s478
        %p480 = scmp.lt.s32.totalorder %s34, 1
        %s481 = scalar_select %p480, %s34, 1
        %s482 = smul.addr %s481, 4
        %s483 = scalar_lea.vmem %s2, %s482
        %p485 = scmp.eq.s32.totalorder %s35, 0
        // Predicated region
        $region65: #{tpu_custom_call.1} parent=63 // pred_check
          %p486 = pneg %p485
        $region66: #{tpu_custom_call.1} parent=63 // pred_check_branch
          %488 = sbr.rel (%p486) target = $region68
        $region67: #{tpu_custom_call.1} parent=63 // pred_region
          %v489 = vld [vmem:[%s479] sm:$0xf]
          %v490 = vld [vmem:[%s479 + $0x4] sm:$0xf]
          %v491 = vld [vmem:[%s479 + $0x8] sm:$0xf]
          %v492 = vld [vmem:[%s479 + $0xc] sm:$0xf]
          %v493 = vld [vmem:[%s483] sm:$0xf]
          %v494 = vld [vmem:[%s5] sm:$0xf]
          %v495 = vld [vmem:[%s6] sm:$0xff]
          %497 = vset.pattern.permute.xlu0 0
          %498 = vperm.xlu0 %497, %v495
          %v499 = vpop.permute.xlu0 %498
          %v505 = vunpack.c.l.b16 %v489
          %v506 = vunpack.c.l.b16 %v490
          %v507 = vunpack.c.l.b16 %v491
          %v508 = vunpack.c.l.b16 %v492
          %v509 = vpack.c.b16 %v506, %v505
          %v510 = vpack.c.b16 %v508, %v507
          %vm513 = vcmask 261120
          %v515 = vsel %vm513, %v494, 0
          %517 = vmatprep.subr.bf16.mxu0 0
          %518 = vmatpush1.bf16.msra.mxu0 %v509
          %519 = vmatprep.subr.bf16.mxu0 0
          %520 = vmatpush1.bf16.msra.mxu0 %v510
          %521 = vmatprep.subr.bf16.mxu0 0
          %522 = vmatpush1.bf16.msra.mxu0 0
          %523 = vmatprep.subr.bf16.mxu0 0
          %524 = vmatpush1.bf16.msra.mxu0 0
          %525 = vmatprep.subr.bf16.mxu0 0
          %526 = vmatpush1.bf16.msra.mxu0 0
          %527 = vmatprep.subr.bf16.mxu0 0
          %528 = vmatpush1.bf16.msra.mxu0 0
          %529 = vmatprep.subr.bf16.mxu0 0
          %530 = vmatpush1.bf16.msra.mxu0 0
          %531 = vmatprep.subr.bf16.mxu0 0
          %532 = vmatpush1.bf16.msra.mxu0 0
          %533 = vmatprep.subr.bf16.mxu0 0
          %534 = vmatpush1.bf16.msra.mxu0 0
          %535 = vmatprep.subr.bf16.mxu0 0
          %536 = vmatpush1.bf16.msra.mxu0 0
          %537 = vmatprep.subr.bf16.mxu0 0
          %538 = vmatpush1.bf16.msra.mxu0 0
          %539 = vmatprep.subr.bf16.mxu0 0
          %540 = vmatpush1.bf16.msra.mxu0 0
          %541 = vmatprep.subr.bf16.mxu0 0
          %542 = vmatpush1.bf16.msra.mxu0 0
          %543 = vmatprep.subr.bf16.mxu0 0
          %544 = vmatpush1.bf16.msra.mxu0 0
          %545 = vmatprep.subr.bf16.mxu0 0
          %546 = vmatpush1.bf16.msra.mxu0 0
          %547 = vmatprep.subr.bf16.mxu0 0
          %548 = vmatpush1.bf16.msra.mxu0 0
          %549 = vmatprep.mubr.bf16.mxu0 0
          %550 = vmatmul.mubr.bf16.gmra.mrb[0].mxu0 %v515
          %v551 = vpop.f32.mrb[0].mxu0
          %v552 = vadd.f32 %v499, %v551
          %v553 = vpop.f32.mrb[0].mxu0
          %v554 = vpop.f32.mrb[0].mxu0
          %v555 = vpop.f32.mrb[0].mxu0
          %556 = vdwg.mxu0
          %v557 = vpack.c.bf16 %v552, %v552
          %vm558 = vcmask 60416
          %559 = vst.msk [vmem:[#allocation2] sm:$0xf] %vm558, %v557
          %v560 = vld [vmem:[%s7] sm:$0xf]
          %v561 = vld [vmem:[%s7 + $0x4] sm:$0xf]
          %v562 = vld [vmem:[%s7 + $0x8] sm:$0xf]
          %v563 = vld [vmem:[%s7 + $0xc] sm:$0xf]
          %v564 = vld [vmem:[%s8] sm:$0x1]
          %v566 = vlaneseq
          %v567 = vshrl.u32 %v566, 7
          %v568 = vsub.s32 0, %v567
          %v569 = vrot.slane %v564, %v568
          %v575 = vunpack.c.l.b16 %v560
          %v576 = vunpack.c.l.b16 %v561
          %v577 = vunpack.c.l.b16 %v562
          %v578 = vunpack.c.l.b16 %v563
          %v579 = vpack.c.b16 %v576, %v575
          %v580 = vpack.c.b16 %v578, %v577
          %v584 = vsel %vm513, %v493, 0
          %586 = vmatprep.subr.bf16.mxu0 0
          %587 = vmatpush1.bf16.msra.mxu0 %v579
          %588 = vmatprep.subr.bf16.mxu0 0
          %589 = vmatpush1.bf16.msra.mxu0 %v580
          %590 = vmatprep.subr.bf16.mxu0 0
          %591 = vmatpush1.bf16.msra.mxu0 0
          %592 = vmatprep.subr.bf16.mxu0 0
          %593 = vmatpush1.bf16.msra.mxu0 0
          %594 = vmatprep.subr.bf16.mxu0 0
          %595 = vmatpush1.bf16.msra.mxu0 0
          %596 = vmatprep.subr.bf16.mxu0 0
          %597 = vmatpush1.bf16.msra.mxu0 0
          %598 = vmatprep.subr.bf16.mxu0 0
          %599 = vmatpush1.bf16.msra.mxu0 0
          %600 = vmatprep.subr.bf16.mxu0 0
          %601 = vmatpush1.bf16.msra.mxu0 0
          %602 = vmatprep.subr.bf16.mxu0 0
          %603 = vmatpush1.bf16.msra.mxu0 0
          %604 = vmatprep.subr.bf16.mxu0 0
          %605 = vmatpush1.bf16.msra.mxu0 0
          %606 = vmatprep.subr.bf16.mxu0 0
          %607 = vmatpush1.bf16.msra.mxu0 0
          %608 = vmatprep.subr.bf16.mxu0 0
          %609 = vmatpush1.bf16.msra.mxu0 0
          %610 = vmatprep.subr.bf16.mxu0 0
          %611 = vmatpush1.bf16.msra.mxu0 0
          %612 = vmatprep.subr.bf16.mxu0 0
          %613 = vmatpush1.bf16.msra.mxu0 0
          %614 = vmatprep.subr.bf16.mxu0 0
          %615 = vmatpush1.bf16.msra.mxu0 0
          %616 = vmatprep.subr.bf16.mxu0 0
          %617 = vmatpush1.bf16.msra.mxu0 0
          %618 = vmatprep.mubr.bf16.mxu0 0
          %619 = vmatmul.mubr.bf16.gmra.mrb[0].mxu0 %v584
          %v620 = vpop.f32.mrb[0].mxu0
          %v621 = vadd.f32 %v569, %v620
          %v622 = vpop.f32.mrb[0].mxu0
          %v623 = vpop.f32.mrb[0].mxu0
          %v624 = vpop.f32.mrb[0].mxu0
          %625 = vdwg.mxu0
          %v626 = vpack.c.bf16 %v621, %v621
          %627 = vst.msk [vmem:[#allocation3] sm:$0xf] %vm558, %v626
          %s628 = scalar_lea.vmem %s5, 4
          %v629 = vld [vmem:[%s628] sm:$0xf]
          %s630 = scalar_lea.vmem %s6, 8
          %v631 = vld [vmem:[%s630] sm:$0xff]
          %633 = vset.pattern.permute.xlu0 0
          %634 = vperm.xlu0 %633, %v631
          %v635 = vpop.permute.xlu0 %634
          %v638 = vsel %vm513, %v629, 0
          %640 = vmatprep.subr.bf16.mxu0 0
          %641 = vmatpush1.bf16.msra.mxu0 %v509
          %642 = vmatprep.subr.bf16.mxu0 0
          %643 = vmatpush1.bf16.msra.mxu0 %v510
          %644 = vmatprep.subr.bf16.mxu0 0
          %645 = vmatpush1.bf16.msra.mxu0 0
          %646 = vmatprep.subr.bf16.mxu0 0
          %647 = vmatpush1.bf16.msra.mxu0 0
          %648 = vmatprep.subr.bf16.mxu0 0
          %649 = vmatpush1.bf16.msra.mxu0 0
          %650 = vmatprep.subr.bf16.mxu0 0
          %651 = vmatpush1.bf16.msra.mxu0 0
          %652 = vmatprep.subr.bf16.mxu0 0
          %653 = vmatpush1.bf16.msra.mxu0 0
          %654 = vmatprep.subr.bf16.mxu0 0
          %655 = vmatpush1.bf16.msra.mxu0 0
          %656 = vmatprep.subr.bf16.mxu0 0
          %657 = vmatpush1.bf16.msra.mxu0 0
          %658 = vmatprep.subr.bf16.mxu0 0
          %659 = vmatpush1.bf16.msra.mxu0 0
          %660 = vmatprep.subr.bf16.mxu0 0
          %661 = vmatpush1.bf16.msra.mxu0 0
          %662 = vmatprep.subr.bf16.mxu0 0
          %663 = vmatpush1.bf16.msra.mxu0 0
          %664 = vmatprep.subr.bf16.mxu0 0
          %665 = vmatpush1.bf16.msra.mxu0 0
          %666 = vmatprep.subr.bf16.mxu0 0
          %667 = vmatpush1.bf16.msra.mxu0 0
          %668 = vmatprep.subr.bf16.mxu0 0
          %669 = vmatpush1.bf16.msra.mxu0 0
          %670 = vmatprep.subr.bf16.mxu0 0
          %671 = vmatpush1.bf16.msra.mxu0 0
          %672 = vmatprep.mubr.bf16.mxu0 0
          %673 = vmatmul.mubr.bf16.gmra.mrb[0].mxu0 %v638
          %v674 = vpop.f32.mrb[0].mxu0
          %v675 = vadd.f32 %v635, %v674
          %v676 = vpop.f32.mrb[0].mxu0
          %v677 = vpop.f32.mrb[0].mxu0
          %v678 = vpop.f32.mrb[0].mxu0
          %679 = vdwg.mxu0
          %v680 = vpack.c.bf16 %v675, %v675
          %s681 = scalar_lea.vmem [#allocation2], 4
          %682 = vst.msk [vmem:[%s681] sm:$0xf] %vm558, %v680
          %s683 = scalar_lea.vmem %s7, 16
          %v684 = vld [vmem:[%s683] sm:$0xf]
          %v685 = vld [vmem:[%s683 + $0x4] sm:$0xf]
          %v686 = vld [vmem:[%s683 + $0x8] sm:$0xf]
          %v687 = vld [vmem:[%s683 + $0xc] sm:$0xf]
          %s688 = scalar_lea.vmem %s8, 1
          %v689 = vld [vmem:[%s688] sm:$0x1]
          %v691 = vlaneseq
          %v692 = vshrl.u32 %v691, 7
          %v693 = vsub.s32 0, %v692
          %v694 = vrot.slane %v689, %v693
          %v700 = vunpack.c.l.b16 %v684
          %v701 = vunpack.c.l.b16 %v685
          %v702 = vunpack.c.l.b16 %v686
          %v703 = vunpack.c.l.b16 %v687
          %v704 = vpack.c.b16 %v701, %v700
          %v705 = vpack.c.b16 %v703, %v702
          %708 = vmatprep.subr.bf16.mxu0 0
          %709 = vmatpush1.bf16.msra.mxu0 %v704
          %710 = vmatprep.subr.bf16.mxu0 0
          %711 = vmatpush1.bf16.msra.mxu0 %v705
          %712 = vmatprep.subr.bf16.mxu0 0
          %713 = vmatpush1.bf16.msra.mxu0 0
          %714 = vmatprep.subr.bf16.mxu0 0
          %715 = vmatpush1.bf16.msra.mxu0 0
          %716 = vmatprep.subr.bf16.mxu0 0
          %717 = vmatpush1.bf16.msra.mxu0 0
          %718 = vmatprep.subr.bf16.mxu0 0
          %719 = vmatpush1.bf16.msra.mxu0 0
          %720 = vmatprep.subr.bf16.mxu0 0
          %721 = vmatpush1.bf16.msra.mxu0 0
          %722 = vmatprep.subr.bf16.mxu0 0
          %723 = vmatpush1.bf16.msra.mxu0 0
          %724 = vmatprep.subr.bf16.mxu0 0
          %725 = vmatpush1.bf16.msra.mxu0 0
          %726 = vmatprep.subr.bf16.mxu0 0
          %727 = vmatpush1.bf16.msra.mxu0 0
          %728 = vmatprep.subr.bf16.mxu0 0
          %729 = vmatpush1.bf16.msra.mxu0 0
          %730 = vmatprep.subr.bf16.mxu0 0
          %731 = vmatpush1.bf16.msra.mxu0 0
          %732 = vmatprep.subr.bf16.mxu0 0
          %733 = vmatpush1.bf16.msra.mxu0 0
          %734 = vmatprep.subr.bf16.mxu0 0
          %735 = vmatpush1.bf16.msra.mxu0 0
          %736 = vmatprep.subr.bf16.mxu0 0
          %737 = vmatpush1.bf16.msra.mxu0 0
          %738 = vmatprep.subr.bf16.mxu0 0
          %739 = vmatpush1.bf16.msra.mxu0 0
          %740 = vmatprep.mubr.bf16.mxu0 0
          %741 = vmatmul.mubr.bf16.gmra.mrb[0].mxu0 %v584
          %v742 = vpop.f32.mrb[0].mxu0
          %v743 = vadd.f32 %v694, %v742
          %v744 = vpop.f32.mrb[0].mxu0
          %v745 = vpop.f32.mrb[0].mxu0
          %v746 = vpop.f32.mrb[0].mxu0
          %747 = vdwg.mxu0
          %v748 = vpack.c.bf16 %v743, %v743
          %s749 = scalar_lea.vmem [#allocation3], 4
          %750 = vst.msk [vmem:[%s749] sm:$0xf] %vm558, %v748
          %s751 = scalar_lea.vmem %s5, 8
          %v752 = vld [vmem:[%s751] sm:$0xf]
          %s753 = scalar_lea.vmem %s6, 16
          %v754 = vld [vmem:[%s753] sm:$0xff]
          %756 = vset.pattern.permute.xlu0 0
          %757 = vperm.xlu0 %756, %v754
          %v758 = vpop.permute.xlu0 %757
          %v761 = vsel %vm513, %v752, 0
          %763 = vmatprep.subr.bf16.mxu0 0
          %764 = vmatpush1.bf16.msra.mxu0 %v509
          %765 = vmatprep.subr.bf16.mxu0 0
          %766 = vmatpush1.bf16.msra.mxu0 %v510
          %767 = vmatprep.subr.bf16.mxu0 0
          %768 = vmatpush1.bf16.msra.mxu0 0
          %769 = vmatprep.subr.bf16.mxu0 0
          %770 = vmatpush1.bf16.msra.mxu0 0
          %771 = vmatprep.subr.bf16.mxu0 0
          %772 = vmatpush1.bf16.msra.mxu0 0
          %773 = vmatprep.subr.bf16.mxu0 0
          %774 = vmatpush1.bf16.msra.mxu0 0
          %775 = vmatprep.subr.bf16.mxu0 0
          %776 = vmatpush1.bf16.msra.mxu0 0
          %777 = vmatprep.subr.bf16.mxu0 0
          %778 = vmatpush1.bf16.msra.mxu0 0
          %779 = vmatprep.subr.bf16.mxu0 0
          %780 = vmatpush1.bf16.msra.mxu0 0
          %781 = vmatprep.subr.bf16.mxu0 0
          %782 = vmatpush1.bf16.msra.mxu0 0
          %783 = vmatprep.subr.bf16.mxu0 0
          %784 = vmatpush1.bf16.msra.mxu0 0
          %785 = vmatprep.subr.bf16.mxu0 0
          %786 = vmatpush1.bf16.msra.mxu0 0
          %787 = vmatprep.subr.bf16.mxu0 0
          %788 = vmatpush1.bf16.msra.mxu0 0
          %789 = vmatprep.subr.bf16.mxu0 0
          %790 = vmatpush1.bf16.msra.mxu0 0
          %791 = vmatprep.subr.bf16.mxu0 0
          %792 = vmatpush1.bf16.msra.mxu0 0
          %793 = vmatprep.subr.bf16.mxu0 0
          %794 = vmatpush1.bf16.msra.mxu0 0
          %795 = vmatprep.mubr.bf16.mxu0 0
          %796 = vmatmul.mubr.bf16.gmra.mrb[0].mxu0 %v761
          %v797 = vpop.f32.mrb[0].mxu0
          %v798 = vadd.f32 %v758, %v797
          %v799 = vpop.f32.mrb[0].mxu0
          %v800 = vpop.f32.mrb[0].mxu0
          %v801 = vpop.f32.mrb[0].mxu0
          %802 = vdwg.mxu0
          %v803 = vpack.c.bf16 %v798, %v798
          %s804 = scalar_lea.vmem [#allocation2], 8
          %805 = vst.msk [vmem:[%s804] sm:$0xf] %vm558, %v803
          %s806 = scalar_lea.vmem %s7, 32
          %v807 = vld [vmem:[%s806] sm:$0xf]
          %v808 = vld [vmem:[%s806 + $0x4] sm:$0xf]
          %v809 = vld [vmem:[%s806 + $0x8] sm:$0xf]
          %v810 = vld [vmem:[%s806 + $0xc] sm:$0xf]
          %s811 = scalar_lea.vmem %s8, 2
          %v812 = vld [vmem:[%s811] sm:$0x1]
          %v814 = vlaneseq
          %v815 = vshrl.u32 %v814, 7
          %v816 = vsub.s32 0, %v815
          %v817 = vrot.slane %v812, %v816
          %v823 = vunpack.c.l.b16 %v807
          %v824 = vunpack.c.l.b16 %v808
          %v825 = vunpack.c.l.b16 %v809
          %v826 = vunpack.c.l.b16 %v810
          %v827 = vpack.c.b16 %v824, %v823
          %v828 = vpack.c.b16 %v826, %v825
          %831 = vmatprep.subr.bf16.mxu0 0
          %832 = vmatpush1.bf16.msra.mxu0 %v827
          %833 = vmatprep.subr.bf16.mxu0 0
          %834 = vmatpush1.bf16.msra.mxu0 %v828
          %835 = vmatprep.subr.bf16.mxu0 0
          %836 = vmatpush1.bf16.msra.mxu0 0
          %837 = vmatprep.subr.bf16.mxu0 0
          %838 = vmatpush1.bf16.msra.mxu0 0
          %839 = vmatprep.subr.bf16.mxu0 0
          %840 = vmatpush1.bf16.msra.mxu0 0
          %841 = vmatprep.subr.bf16.mxu0 0
          %842 = vmatpush1.bf16.msra.mxu0 0
          %843 = vmatprep.subr.bf16.mxu0 0
          %844 = vmatpush1.bf16.msra.mxu0 0
          %845 = vmatprep.subr.bf16.mxu0 0
          %846 = vmatpush1.bf16.msra.mxu0 0
          %847 = vmatprep.subr.bf16.mxu0 0
          %848 = vmatpush1.bf16.msra.mxu0 0
          %849 = vmatprep.subr.bf16.mxu0 0
          %850 = vmatpush1.bf16.msra.mxu0 0
          %851 = vmatprep.subr.bf16.mxu0 0
          %852 = vmatpush1.bf16.msra.mxu0 0
          %853 = vmatprep.subr.bf16.mxu0 0
          %854 = vmatpush1.bf16.msra.mxu0 0
          %855 = vmatprep.subr.bf16.mxu0 0
          %856 = vmatpush1.bf16.msra.mxu0 0
          %857 = vmatprep.subr.bf16.mxu0 0
          %858 = vmatpush1.bf16.msra.mxu0 0
          %859 = vmatprep.subr.bf16.mxu0 0
          %860 = vmatpush1.bf16.msra.mxu0 0
          %861 = vmatprep.subr.bf16.mxu0 0
          %862 = vmatpush1.bf16.msra.mxu0 0
          %863 = vmatprep.mubr.bf16.mxu0 0
          %864 = vmatmul.mubr.bf16.gmra.mrb[0].mxu0 %v584
          %v865 = vpop.f32.mrb[0].mxu0
          %v866 = vadd.f32 %v817, %v865
          %v867 = vpop.f32.mrb[0].mxu0
          %v868 = vpop.f32.mrb[0].mxu0
          %v869 = vpop.f32.mrb[0].mxu0
          %870 = vdwg.mxu0
          %v871 = vpack.c.bf16 %v866, %v866
          %s872 = scalar_lea.vmem [#allocation3], 8
          %873 = vst.msk [vmem:[%s872] sm:$0xf] %vm558, %v871
          %s874 = scalar_lea.vmem %s5, 12
          %v875 = vld [vmem:[%s874] sm:$0xf]
          %s876 = scalar_lea.vmem %s6, 24
          %v877 = vld [vmem:[%s876] sm:$0xff]
          %879 = vset.pattern.permute.xlu0 0
          %880 = vperm.xlu0 %879, %v877
          %v881 = vpop.permute.xlu0 %880
          %v884 = vsel %vm513, %v875, 0
          %886 = vmatprep.subr.bf16.mxu0 0
          %887 = vmatpush1.bf16.msra.mxu0 %v509
          %888 = vmatprep.subr.bf16.mxu0 0
          %889 = vmatpush1.bf16.msra.mxu0 %v510
          %890 = vmatprep.subr.bf16.mxu0 0
          %891 = vmatpush1.bf16.msra.mxu0 0
          %892 = vmatprep.subr.bf16.mxu0 0
          %893 = vmatpush1.bf16.msra.mxu0 0
          %894 = vmatprep.subr.bf16.mxu0 0
          %895 = vmatpush1.bf16.msra.mxu0 0
          %896 = vmatprep.subr.bf16.mxu0 0
          %897 = vmatpush1.bf16.msra.mxu0 0
          %898 = vmatprep.subr.bf16.mxu0 0
          %899 = vmatpush1.bf16.msra.mxu0 0
          %900 = vmatprep.subr.bf16.mxu0 0
          %901 = vmatpush1.bf16.msra.mxu0 0
          %902 = vmatprep.subr.bf16.mxu0 0
          %903 = vmatpush1.bf16.msra.mxu0 0
          %904 = vmatprep.subr.bf16.mxu0 0
          %905 = vmatpush1.bf16.msra.mxu0 0
          %906 = vmatprep.subr.bf16.mxu0 0
          %907 = vmatpush1.bf16.msra.mxu0 0
          %908 = vmatprep.subr.bf16.mxu0 0
          %909 = vmatpush1.bf16.msra.mxu0 0
          %910 = vmatprep.subr.bf16.mxu0 0
          %911 = vmatpush1.bf16.msra.mxu0 0
          %912 = vmatprep.subr.bf16.mxu0 0
          %913 = vmatpush1.bf16.msra.mxu0 0
          %914 = vmatprep.subr.bf16.mxu0 0
          %915 = vmatpush1.bf16.msra.mxu0 0
          %916 = vmatprep.subr.bf16.mxu0 0
          %917 = vmatpush1.bf16.msra.mxu0 0
          %918 = vmatprep.mubr.bf16.mxu0 0
          %919 = vmatmul.mubr.bf16.gmra.mrb[0].mxu0 %v884
          %v920 = vpop.f32.mrb[0].mxu0
          %v921 = vadd.f32 %v881, %v920
          %v922 = vpop.f32.mrb[0].mxu0
          %v923 = vpop.f32.mrb[0].mxu0
          %v924 = vpop.f32.mrb[0].mxu0
          %925 = vdwg.mxu0
          %v926 = vpack.c.bf16 %v921, %v921
          %s927 = scalar_lea.vmem [#allocation2], 12
          %928 = vst.msk [vmem:[%s927] sm:$0xf] %vm558, %v926
          %s929 = scalar_lea.vmem %s7, 48
          %v930 = vld [vmem:[%s929] sm:$0xf]
          %v931 = vld [vmem:[%s929 + $0x4] sm:$0xf]
          %v932 = vld [vmem:[%s929 + $0x8] sm:$0xf]
          %v933 = vld [vmem:[%s929 + $0xc] sm:$0xf]
          %s934 = scalar_lea.vmem %s8, 3
          %v935 = vld [vmem:[%s934] sm:$0x1]
          %v937 = vlaneseq
          %v938 = vshrl.u32 %v937, 7
          %v939 = vsub.s32 0, %v938
          %v940 = vrot.slane %v935, %v939
          %v946 = vunpack.c.l.b16 %v930
          %v947 = vunpack.c.l.b16 %v931
          %v948 = vunpack.c.l.b16 %v932
          %v949 = vunpack.c.l.b16 %v933
          %v950 = vpack.c.b16 %v947, %v946
          %v951 = vpack.c.b16 %v949, %v948
          %954 = vmatprep.subr.bf16.mxu0 0
          %955 = vmatpush1.bf16.msra.mxu0 %v950
          %956 = vmatprep.subr.bf16.mxu0 0
          %957 = vmatpush1.bf16.msra.mxu0 %v951
          %958 = vmatprep.subr.bf16.mxu0 0
          %959 = vmatpush1.bf16.msra.mxu0 0
          %960 = vmatprep.subr.bf16.mxu0 0
          %961 = vmatpush1.bf16.msra.mxu0 0
          %962 = vmatprep.subr.bf16.mxu0 0
          %963 = vmatpush1.bf16.msra.mxu0 0
          %964 = vmatprep.subr.bf16.mxu0 0
          %965 = vmatpush1.bf16.msra.mxu0 0
          %966 = vmatprep.subr.bf16.mxu0 0
          %967 = vmatpush1.bf16.msra.mxu0 0
          %968 = vmatprep.subr.bf16.mxu0 0
          %969 = vmatpush1.bf16.msra.mxu0 0
          %970 = vmatprep.subr.bf16.mxu0 0
          %971 = vmatpush1.bf16.msra.mxu0 0
          %972 = vmatprep.subr.bf16.mxu0 0
          %973 = vmatpush1.bf16.msra.mxu0 0
          %974 = vmatprep.subr.bf16.mxu0 0
          %975 = vmatpush1.bf16.msra.mxu0 0
          %976 = vmatprep.subr.bf16.mxu0 0
          %977 = vmatpush1.bf16.msra.mxu0 0
          %978 = vmatprep.subr.bf16.mxu0 0
          %979 = vmatpush1.bf16.msra.mxu0 0
          %980 = vmatprep.subr.bf16.mxu0 0
          %981 = vmatpush1.bf16.msra.mxu0 0
          %982 = vmatprep.subr.bf16.mxu0 0
          %983 = vmatpush1.bf16.msra.mxu0 0
          %984 = vmatprep.subr.bf16.mxu0 0
          %985 = vmatpush1.bf16.msra.mxu0 0
          %986 = vmatprep.mubr.bf16.mxu0 0
          %987 = vmatmul.mubr.bf16.gmra.mrb[0].mxu0 %v584
          %v988 = vpop.f32.mrb[0].mxu0
          %v989 = vadd.f32 %v940, %v988
          %v990 = vpop.f32.mrb[0].mxu0
          %v991 = vpop.f32.mrb[0].mxu0
          %v992 = vpop.f32.mrb[0].mxu0
          %993 = vdwg.mxu0
          %v994 = vpack.c.bf16 %v989, %v989
          %s995 = scalar_lea.vmem [#allocation3], 12
          %996 = vst.msk [vmem:[%s995] sm:$0xf] %vm558, %v994
        $region68: #{tpu_custom_call.1} parent=63 // pred_fallthru
          _
        %v997 = vld [vmem:[%s474] sm:$0xf]
        %v998 = vld [vmem:[%s10] sm:$0x1]
        %v1000 = vlaneseq
        %v1001 = vshrl.u32 %v1000, 7
        %v1002 = vsub.s32 0, %v1001
        %v1003 = vrot.slane %v998, %v1002
        %vm1005 = vcmask 261120
        %1006 = vst.msk [vmem:[#allocation4] sm:$0xff] %vm1005, %v1003
        %v1007 = vld [vmem:[%s3] sm:$0xf]
        %v1008 = vld [vmem:[%s3 + $0x4] sm:$0xf]
        %v1009 = vld [vmem:[%s3 + $0x8] sm:$0xf]
        %v1010 = vld [vmem:[%s3 + $0xc] sm:$0xf]
        %v1011 = vld [vmem:[%s4] sm:$0x1]
        %v1013 = vlaneseq
        %v1014 = vshrl.u32 %v1013, 7
        %v1015 = vsub.s32 0, %v1014
        %v1016 = vrot.slane %v1011, %v1015
        %v1022 = vunpack.c.l.b16 %v1007
        %v1023 = vunpack.c.l.b16 %v1008
        %v1024 = vunpack.c.l.b16 %v1009
        %v1025 = vunpack.c.l.b16 %v1010
        %v1026 = vpack.c.b16 %v1023, %v1022
        %v1027 = vpack.c.b16 %v1025, %v1024
        %v1031 = vsel %vm1005, %v997, 0
        %1033 = vmatprep.subr.bf16.mxu0 0
        %1034 = vmatpush1.bf16.msra.mxu0 %v1026
        %1035 = vmatprep.subr.bf16.mxu0 0
        %1036 = vmatpush1.bf16.msra.mxu0 %v1027
        %1037 = vmatprep.subr.bf16.mxu0 0
        %1038 = vmatpush1.bf16.msra.mxu0 0
        %1039 = vmatprep.subr.bf16.mxu0 0
        %1040 = vmatpush1.bf16.msra.mxu0 0
        %1041 = vmatprep.subr.bf16.mxu0 0
        %1042 = vmatpush1.bf16.msra.mxu0 0
        %1043 = vmatprep.subr.bf16.mxu0 0
        %1044 = vmatpush1.bf16.msra.mxu0 0
        %1045 = vmatprep.subr.bf16.mxu0 0
        %1046 = vmatpush1.bf16.msra.mxu0 0
        %1047 = vmatprep.subr.bf16.mxu0 0
        %1048 = vmatpush1.bf16.msra.mxu0 0
        %1049 = vmatprep.subr.bf16.mxu0 0
        %1050 = vmatpush1.bf16.msra.mxu0 0
        %1051 = vmatprep.subr.bf16.mxu0 0
        %1052 = vmatpush1.bf16.msra.mxu0 0
        %1053 = vmatprep.subr.bf16.mxu0 0
        %1054 = vmatpush1.bf16.msra.mxu0 0
        %1055 = vmatprep.subr.bf16.mxu0 0
        %1056 = vmatpush1.bf16.msra.mxu0 0
        %1057 = vmatprep.subr.bf16.mxu0 0
        %1058 = vmatpush1.bf16.msra.mxu0 0
        %1059 = vmatprep.subr.bf16.mxu0 0
        %1060 = vmatpush1.bf16.msra.mxu0 0
        %1061 = vmatprep.subr.bf16.mxu0 0
        %1062 = vmatpush1.bf16.msra.mxu0 0
        %1063 = vmatprep.subr.bf16.mxu0 0
        %1064 = vmatpush1.bf16.msra.mxu0 0
        %1065 = vmatprep.mubr.bf16.mxu0 0
        %1066 = vmatmul.mubr.bf16.gmra.mrb[0].mxu0 %v1031
        %v1067 = vpop.f32.mrb[0].mxu0
        %v1068 = vadd.f32 %v1016, %v1067
        %v1069 = vpop.f32.mrb[0].mxu0
        %v1070 = vpop.f32.mrb[0].mxu0
        %v1071 = vpop.f32.mrb[0].mxu0
        %1072 = vdwg.mxu0
        %v1073 = vpack.c.bf16 %v1068, %v1068
        %v1074 = vld [vmem:[#allocation2] sm:$0xf]
        %vm1075 = vcmask 64512
        %v1077 = vsel %vm1075, %v1073, 0
        %vm1079 = vcmask 1043456
        %v1081 = vsel %vm1079, %v1074, 0
        %1083 = vmatprep.subr.bf16.mxu0 0
        %1084 = vmatpush1.bf16.msra.mxu0 %v1081
        %1085 = vmatprep.subr.bf16.mxu0 0
        %1086 = vmatpush1.bf16.msra.mxu0 0
        %1087 = vmatprep.subr.bf16.mxu0 0
        %1088 = vmatpush1.bf16.msra.mxu0 0
        %1089 = vmatprep.subr.bf16.mxu0 0
        %1090 = vmatpush1.bf16.msra.mxu0 0
        %1091 = vmatprep.subr.bf16.mxu0 0
        %1092 = vmatpush1.bf16.msra.mxu0 0
        %1093 = vmatprep.subr.bf16.mxu0 0
        %1094 = vmatpush1.bf16.msra.mxu0 0
        %1095 = vmatprep.subr.bf16.mxu0 0
        %1096 = vmatpush1.bf16.msra.mxu0 0
        %1097 = vmatprep.subr.bf16.mxu0 0
        %1098 = vmatpush1.bf16.msra.mxu0 0
        %1099 = vmatprep.subr.bf16.mxu0 0
        %1100 = vmatpush1.bf16.msra.mxu0 0
        %1101 = vmatprep.subr.bf16.mxu0 0
        %1102 = vmatpush1.bf16.msra.mxu0 0
        %1103 = vmatprep.subr.bf16.mxu0 0
        %1104 = vmatpush1.bf16.msra.mxu0 0
        %1105 = vmatprep.subr.bf16.mxu0 0
        %1106 = vmatpush1.bf16.msra.mxu0 0
        %1107 = vmatprep.subr.bf16.mxu0 0
        %1108 = vmatpush1.bf16.msra.mxu0 0
        %1109 = vmatprep.subr.bf16.mxu0 0
        %1110 = vmatpush1.bf16.msra.mxu0 0
        %1111 = vmatprep.subr.bf16.mxu0 0
        %1112 = vmatpush1.bf16.msra.mxu0 0
        %1113 = vmatprep.subr.bf16.mxu0 0
        %1114 = vmatpush1.bf16.msra.mxu0 0
        %1115 = vmatprep.mubr.bf16.mxu0 0
        %1116 = vmatmul.mubr.bf16.gmra.mrb[0].mxu0 %v1077
        %v1117 = vpop.f32.mrb[0].mxu0
        %v1118 = vadd.f32 0.0, %v1117
        %v1119 = vpop.f32.mrb[0].mxu0
        %v1120 = vpop.f32.mrb[0].mxu0
        %v1121 = vpop.f32.mrb[0].mxu0
        %1122 = vdwg.mxu0
        %v1123 = vsel %vm1075, %v1118, -inf
        %1124 = vmax.xlane.f32.xlu0 %v1123
        %v1125 = vpop.xlane.xlu0 %1124
        %v1126 = vsub.f32 %v1118, %v1125
        %v1127 = vmul.f32 %v1126, 1.442695
        %v1128 = vpow.pop %v1127
        %v1129 = vsel %vm1075, %v1128, 0.0
        %1130 = vadd.xlane.f32.xlu0 %v1129
        %v1131 = vpop.xlane.xlu0 %1130
        %v1132 = vrcp.pop %v1131
        %v1133 = vmul.f32 %v1128, %v1132
        %1134 = vst.msk [vmem:[%s467] sm:$0xff] %vm1075, %v1133
        %v1135 = vpack.c.bf16 %v1133, %v1133
        %v1136 = vld [vmem:[#allocation3] sm:$0xf]
        %v1138 = vsel %vm1075, %v1135, 0
        %v1141 = vsel %vm1079, %v1136, 0
        %1143 = vmatprep.subr.bf16.mxu0 0
        %1144 = vmatpush1.bf16.msra.mxu0 %v1141
        %1145 = vmatprep.subr.bf16.mxu0 0
        %1146 = vmatpush1.bf16.msra.mxu0 0
        %1147 = vmatprep.subr.bf16.mxu0 0
        %1148 = vmatpush1.bf16.msra.mxu0 0
        %1149 = vmatprep.subr.bf16.mxu0 0
        %1150 = vmatpush1.bf16.msra.mxu0 0
        %1151 = vmatprep.subr.bf16.mxu0 0
        %1152 = vmatpush1.bf16.msra.mxu0 0
        %1153 = vmatprep.subr.bf16.mxu0 0
        %1154 = vmatpush1.bf16.msra.mxu0 0
        %1155 = vmatprep.subr.bf16.mxu0 0
        %1156 = vmatpush1.bf16.msra.mxu0 0
        %1157 = vmatprep.subr.bf16.mxu0 0
        %1158 = vmatpush1.bf16.msra.mxu0 0
        %1159 = vmatprep.subr.bf16.mxu0 0
        %1160 = vmatpush1.bf16.msra.mxu0 0
        %1161 = vmatprep.subr.bf16.mxu0 0
        %1162 = vmatpush1.bf16.msra.mxu0 0
        %1163 = vmatprep.subr.bf16.mxu0 0
        %1164 = vmatpush1.bf16.msra.mxu0 0
        %1165 = vmatprep.subr.bf16.mxu0 0
        %1166 = vmatpush1.bf16.msra.mxu0 0
        %1167 = vmatprep.subr.bf16.mxu0 0
        %1168 = vmatpush1.bf16.msra.mxu0 0
        %1169 = vmatprep.subr.bf16.mxu0 0
        %1170 = vmatpush1.bf16.msra.mxu0 0
        %1171 = vmatprep.subr.bf16.mxu0 0
        %1172 = vmatpush1.bf16.msra.mxu0 0
        %1173 = vmatprep.subr.bf16.mxu0 0
        %1174 = vmatpush1.bf16.msra.mxu0 0
        %1175 = vmatprep.mubr.bf16.mxu0 0
        %1176 = vmatmul.mubr.bf16.gmra.mrb[0].mxu0 %v1138
        %v1177 = vpop.f32.mrb[0].mxu0
        %v1178 = vadd.f32 0.0, %v1177
        %v1179 = vpop.f32.mrb[0].mxu0
        %v1180 = vpop.f32.mrb[0].mxu0
        %v1181 = vpop.f32.mrb[0].mxu0
        %1182 = vdwg.mxu0
        %v1183 = vld [vmem:[#allocation4] sm:$0xff]
        %v1184 = vpack.c.bf16 %v1178, %v1178
        %v1185 = vld [vmem:[%s9] sm:$0xf]
        %v1187 = vsel %vm1075, %v1184, 0
        %v1190 = vsel %vm1079, %v1185, 0
        %1192 = vmatprep.subr.bf16.mxu0 0
        %1193 = vmatpush1.bf16.msra.mxu0 %v1190
        %1194 = vmatprep.subr.bf16.mxu0 0
        %1195 = vmatpush1.bf16.msra.mxu0 0
        %1196 = vmatprep.subr.bf16.mxu0 0
        %1197 = vmatpush1.bf16.msra.mxu0 0
        %1198 = vmatprep.subr.bf16.mxu0 0
        %1199 = vmatpush1.bf16.msra.mxu0 0
        %1200 = vmatprep.subr.bf16.mxu0 0
        %1201 = vmatpush1.bf16.msra.mxu0 0
        %1202 = vmatprep.subr.bf16.mxu0 0
        %1203 = vmatpush1.bf16.msra.mxu0 0
        %1204 = vmatprep.subr.bf16.mxu0 0
        %1205 = vmatpush1.bf16.msra.mxu0 0
        %1206 = vmatprep.subr.bf16.mxu0 0
        %1207 = vmatpush1.bf16.msra.mxu0 0
        %1208 = vmatprep.subr.bf16.mxu0 0
        %1209 = vmatpush1.bf16.msra.mxu0 0
        %1210 = vmatprep.subr.bf16.mxu0 0
        %1211 = vmatpush1.bf16.msra.mxu0 0
        %1212 = vmatprep.subr.bf16.mxu0 0
        %1213 = vmatpush1.bf16.msra.mxu0 0
        %1214 = vmatprep.subr.bf16.mxu0 0
        %1215 = vmatpush1.bf16.msra.mxu0 0
        %1216 = vmatprep.subr.bf16.mxu0 0
        %1217 = vmatpush1.bf16.msra.mxu0 0
        %1218 = vmatprep.subr.bf16.mxu0 0
        %1219 = vmatpush1.bf16.msra.mxu0 0
        %1220 = vmatprep.subr.bf16.mxu0 0
        %1221 = vmatpush1.bf16.msra.mxu0 0
        %1222 = vmatprep.subr.bf16.mxu0 0
        %1223 = vmatpush1.bf16.msra.mxu0 0
        %1224 = vmatprep.mubr.bf16.mxu0 0
        %1225 = vmatmul.mubr.bf16.gmra.mrb[0].mxu0 %v1187
        %v1226 = vpop.f32.mrb[0].mxu0
        %v1227 = vadd.f32 0.0, %v1226
        %v1228 = vpop.f32.mrb[0].mxu0
        %v1229 = vpop.f32.mrb[0].mxu0
        %v1230 = vpop.f32.mrb[0].mxu0
        %1231 = vdwg.mxu0
        %v1232 = vadd.f32 %v1183, %v1227
        %1233 = vst.msk [vmem:[#allocation4] sm:$0xff] %vm1005, %v1232
        %s1234 = scalar_lea.vmem %s3, 16
        %v1235 = vld [vmem:[%s1234] sm:$0xf]
        %v1236 = vld [vmem:[%s1234 + $0x4] sm:$0xf]
        %v1237 = vld [vmem:[%s1234 + $0x8] sm:$0xf]
        %v1238 = vld [vmem:[%s1234 + $0xc] sm:$0xf]
        %s1239 = scalar_lea.vmem %s4, 1
        %v1240 = vld [vmem:[%s1239] sm:$0x1]
        %v1242 = vlaneseq
        %v1243 = vshrl.u32 %v1242, 7
        %v1244 = vsub.s32 0, %v1243
        %v1245 = vrot.slane %v1240, %v1244
        %v1251 = vunpack.c.l.b16 %v1235
        %v1252 = vunpack.c.l.b16 %v1236
        %v1253 = vunpack.c.l.b16 %v1237
        %v1254 = vunpack.c.l.b16 %v1238
        %v1255 = vpack.c.b16 %v1252, %v1251
        %v1256 = vpack.c.b16 %v1254, %v1253
        %1259 = vmatprep.subr.bf16.mxu0 0
        %1260 = vmatpush1.bf16.msra.mxu0 %v1255
        %1261 = vmatprep.subr.bf16.mxu0 0
        %1262 = vmatpush1.bf16.msra.mxu0 %v1256
        %1263 = vmatprep.subr.bf16.mxu0 0
        %1264 = vmatpush1.bf16.msra.mxu0 0
        %1265 = vmatprep.subr.bf16.mxu0 0
        %1266 = vmatpush1.bf16.msra.mxu0 0
        %1267 = vmatprep.subr.bf16.mxu0 0
        %1268 = vmatpush1.bf16.msra.mxu0 0
        %1269 = vmatprep.subr.bf16.mxu0 0
        %1270 = vmatpush1.bf16.msra.mxu0 0
        %1271 = vmatprep.subr.bf16.mxu0 0
        %1272 = vmatpush1.bf16.msra.mxu0 0
        %1273 = vmatprep.subr.bf16.mxu0 0
        %1274 = vmatpush1.bf16.msra.mxu0 0
        %1275 = vmatprep.subr.bf16.mxu0 0
        %1276 = vmatpush1.bf16.msra.mxu0 0
        %1277 = vmatprep.subr.bf16.mxu0 0
        %1278 = vmatpush1.bf16.msra.mxu0 0
        %1279 = vmatprep.subr.bf16.mxu0 0
        %1280 = vmatpush1.bf16.msra.mxu0 0
        %1281 = vmatprep.subr.bf16.mxu0 0
        %1282 = vmatpush1.bf16.msra.mxu0 0
        %1283 = vmatprep.subr.bf16.mxu0 0
        %1284 = vmatpush1.bf16.msra.mxu0 0
        %1285 = vmatprep.subr.bf16.mxu0 0
        %1286 = vmatpush1.bf16.msra.mxu0 0
        %1287 = vmatprep.subr.bf16.mxu0 0
        %1288 = vmatpush1.bf16.msra.mxu0 0
        %1289 = vmatprep.subr.bf16.mxu0 0
        %1290 = vmatpush1.bf16.msra.mxu0 0
        %1291 = vmatprep.mubr.bf16.mxu0 0
        %1292 = vmatmul.mubr.bf16.gmra.mrb[0].mxu0 %v1031
        %v1293 = vpop.f32.mrb[0].mxu0
        %v1294 = vadd.f32 %v1245, %v1293
        %v1295 = vpop.f32.mrb[0].mxu0
        %v1296 = vpop.f32.mrb[0].mxu0
        %v1297 = vpop.f32.mrb[0].mxu0
        %1298 = vdwg.mxu0
        %v1299 = vpack.c.bf16 %v1294, %v1294
        %s1300 = scalar_lea.vmem [#allocation2], 4
        %v1301 = vld [vmem:[%s1300] sm:$0xf]
        %v1303 = vsel %vm1075, %v1299, 0
        %v1306 = vsel %vm1079, %v1301, 0
        %1308 = vmatprep.subr.bf16.mxu0 0
        %1309 = vmatpush1.bf16.msra.mxu0 %v1306
        %1310 = vmatprep.subr.bf16.mxu0 0
        %1311 = vmatpush1.bf16.msra.mxu0 0
        %1312 = vmatprep.subr.bf16.mxu0 0
        %1313 = vmatpush1.bf16.msra.mxu0 0
        %1314 = vmatprep.subr.bf16.mxu0 0
        %1315 = vmatpush1.bf16.msra.mxu0 0
        %1316 = vmatprep.subr.bf16.mxu0 0
        %1317 = vmatpush1.bf16.msra.mxu0 0
        %1318 = vmatprep.subr.bf16.mxu0 0
        %1319 = vmatpush1.bf16.msra.mxu0 0
        %1320 = vmatprep.subr.bf16.mxu0 0
        %1321 = vmatpush1.bf16.msra.mxu0 0
        %1322 = vmatprep.subr.bf16.mxu0 0
        %1323 = vmatpush1.bf16.msra.mxu0 0
        %1324 = vmatprep.subr.bf16.mxu0 0
        %1325 = vmatpush1.bf16.msra.mxu0 0
        %1326 = vmatprep.subr.bf16.mxu0 0
        %1327 = vmatpush1.bf16.msra.mxu0 0
        %1328 = vmatprep.subr.bf16.mxu0 0
        %1329 = vmatpush1.bf16.msra.mxu0 0
        %1330 = vmatprep.subr.bf16.mxu0 0
        %1331 = vmatpush1.bf16.msra.mxu0 0
        %1332 = vmatprep.subr.bf16.mxu0 0
        %1333 = vmatpush1.bf16.msra.mxu0 0
        %1334 = vmatprep.subr.bf16.mxu0 0
        %1335 = vmatpush1.bf16.msra.mxu0 0
        %1336 = vmatprep.subr.bf16.mxu0 0
        %1337 = vmatpush1.bf16.msra.mxu0 0
        %1338 = vmatprep.subr.bf16.mxu0 0
        %1339 = vmatpush1.bf16.msra.mxu0 0
        %1340 = vmatprep.mubr.bf16.mxu0 0
        %1341 = vmatmul.mubr.bf16.gmra.mrb[0].mxu0 %v1303
        %v1342 = vpop.f32.mrb[0].mxu0
        %v1343 = vadd.f32 0.0, %v1342
        %v1344 = vpop.f32.mrb[0].mxu0
        %v1345 = vpop.f32.mrb[0].mxu0
        %v1346 = vpop.f32.mrb[0].mxu0
        %1347 = vdwg.mxu0
        %v1348 = vsel %vm1075, %v1343, -inf
        %1349 = vmax.xlane.f32.xlu0 %v1348
        %v1350 = vpop.xlane.xlu0 %1349
        %v1351 = vsub.f32 %v1343, %v1350
        %v1352 = vmul.f32 %v1351, 1.442695
        %v1353 = vpow.pop %v1352
        %v1354 = vsel %vm1075, %v1353, 0.0
        %1355 = vadd.xlane.f32.xlu0 %v1354
        %v1356 = vpop.xlane.xlu0 %1355
        %v1357 = vrcp.pop %v1356
        %v1358 = vmul.f32 %v1353, %v1357
        %s1359 = scalar_lea.vmem %s467, 8 [#allocation7]
        %1360 = vst.msk [vmem:[%s1359] sm:$0xff] %vm1075, %v1358
        %v1361 = vpack.c.bf16 %v1358, %v1358
        %s1362 = scalar_lea.vmem [#allocation3], 4
        %v1363 = vld [vmem:[%s1362] sm:$0xf]
        %v1365 = vsel %vm1075, %v1361, 0
        %v1368 = vsel %vm1079, %v1363, 0
        %1370 = vmatprep.subr.bf16.mxu0 0
        %1371 = vmatpush1.bf16.msra.mxu0 %v1368
        %1372 = vmatprep.subr.bf16.mxu0 0
        %1373 = vmatpush1.bf16.msra.mxu0 0
        %1374 = vmatprep.subr.bf16.mxu0 0
        %1375 = vmatpush1.bf16.msra.mxu0 0
        %1376 = vmatprep.subr.bf16.mxu0 0
        %1377 = vmatpush1.bf16.msra.mxu0 0
        %1378 = vmatprep.subr.bf16.mxu0 0
        %1379 = vmatpush1.bf16.msra.mxu0 0
        %1380 = vmatprep.subr.bf16.mxu0 0
        %1381 = vmatpush1.bf16.msra.mxu0 0
        %1382 = vmatprep.subr.bf16.mxu0 0
        %1383 = vmatpush1.bf16.msra.mxu0 0
        %1384 = vmatprep.subr.bf16.mxu0 0
        %1385 = vmatpush1.bf16.msra.mxu0 0
        %1386 = vmatprep.subr.bf16.mxu0 0
        %1387 = vmatpush1.bf16.msra.mxu0 0
        %1388 = vmatprep.subr.bf16.mxu0 0
        %1389 = vmatpush1.bf16.msra.mxu0 0
        %1390 = vmatprep.subr.bf16.mxu0 0
        %1391 = vmatpush1.bf16.msra.mxu0 0
        %1392 = vmatprep.subr.bf16.mxu0 0
        %1393 = vmatpush1.bf16.msra.mxu0 0
        %1394 = vmatprep.subr.bf16.mxu0 0
        %1395 = vmatpush1.bf16.msra.mxu0 0
        %1396 = vmatprep.subr.bf16.mxu0 0
        %1397 = vmatpush1.bf16.msra.mxu0 0
        %1398 = vmatprep.subr.bf16.mxu0 0
        %1399 = vmatpush1.bf16.msra.mxu0 0
        %1400 = vmatprep.subr.bf16.mxu0 0
        %1401 = vmatpush1.bf16.msra.mxu0 0
        %1402 = vmatprep.mubr.bf16.mxu0 0
        %1403 = vmatmul.mubr.bf16.gmra.mrb[0].mxu0 %v1365
        %v1404 = vpop.f32.mrb[0].mxu0
        %v1405 = vadd.f32 0.0, %v1404
        %v1406 = vpop.f32.mrb[0].mxu0
        %v1407 = vpop.f32.mrb[0].mxu0
        %v1408 = vpop.f32.mrb[0].mxu0
        %1409 = vdwg.mxu0
        %v1410 = vld [vmem:[#allocation4] sm:$0xff]
        %v1411 = vpack.c.bf16 %v1405, %v1405
        %s1412 = scalar_lea.vmem %s9, 4
        %v1413 = vld [vmem:[%s1412] sm:$0xf]
        %v1415 = vsel %vm1075, %v1411, 0
        %v1418 = vsel %vm1079, %v1413, 0
        %1420 = vmatprep.subr.bf16.mxu0 0
        %1421 = vmatpush1.bf16.msra.mxu0 %v1418
        %1422 = vmatprep.subr.bf16.mxu0 0
        %1423 = vmatpush1.bf16.msra.mxu0 0
        %1424 = vmatprep.subr.bf16.mxu0 0
        %1425 = vmatpush1.bf16.msra.mxu0 0
        %1426 = vmatprep.subr.bf16.mxu0 0
        %1427 = vmatpush1.bf16.msra.mxu0 0
        %1428 = vmatprep.subr.bf16.mxu0 0
        %1429 = vmatpush1.bf16.msra.mxu0 0
        %1430 = vmatprep.subr.bf16.mxu0 0
        %1431 = vmatpush1.bf16.msra.mxu0 0
        %1432 = vmatprep.subr.bf16.mxu0 0
        %1433 = vmatpush1.bf16.msra.mxu0 0
        %1434 = vmatprep.subr.bf16.mxu0 0
        %1435 = vmatpush1.bf16.msra.mxu0 0
        %1436 = vmatprep.subr.bf16.mxu0 0
        %1437 = vmatpush1.bf16.msra.mxu0 0
        %1438 = vmatprep.subr.bf16.mxu0 0
        %1439 = vmatpush1.bf16.msra.mxu0 0
        %1440 = vmatprep.subr.bf16.mxu0 0
        %1441 = vmatpush1.bf16.msra.mxu0 0
        %1442 = vmatprep.subr.bf16.mxu0 0
        %1443 = vmatpush1.bf16.msra.mxu0 0
        %1444 = vmatprep.subr.bf16.mxu0 0
        %1445 = vmatpush1.bf16.msra.mxu0 0
        %1446 = vmatprep.subr.bf16.mxu0 0
        %1447 = vmatpush1.bf16.msra.mxu0 0
        %1448 = vmatprep.subr.bf16.mxu0 0
        %1449 = vmatpush1.bf16.msra.mxu0 0
        %1450 = vmatprep.subr.bf16.mxu0 0
        %1451 = vmatpush1.bf16.msra.mxu0 0
        %1452 = vmatprep.mubr.bf16.mxu0 0
        %1453 = vmatmul.mubr.bf16.gmra.mrb[0].mxu0 %v1415
        %v1454 = vpop.f32.mrb[0].mxu0
        %v1455 = vadd.f32 0.0, %v1454
        %v1456 = vpop.f32.mrb[0].mxu0
        %v1457 = vpop.f32.mrb[0].mxu0
        %v1458 = vpop.f32.mrb[0].mxu0
        %1459 = vdwg.mxu0
        %v1460 = vadd.f32 %v1410, %v1455
        %1461 = vst.msk [vmem:[#allocation4] sm:$0xff] %vm1005, %v1460
        %s1462 = scalar_lea.vmem %s3, 32
        %v1463 = vld [vmem:[%s1462] sm:$0xf]
        %v1464 = vld [vmem:[%s1462 + $0x4] sm:$0xf]
        %v1465 = vld [vmem:[%s1462 + $0x8] sm:$0xf]
        %v1466 = vld [vmem:[%s1462 + $0xc] sm:$0xf]
        %s1467 = scalar_lea.vmem %s4, 2
        %v1468 = vld [vmem:[%s1467] sm:$0x1]
        %v1470 = vlaneseq
        %v1471 = vshrl.u32 %v1470, 7
        %v1472 = vsub.s32 0, %v1471
        %v1473 = vrot.slane %v1468, %v1472
        %v1479 = vunpack.c.l.b16 %v1463
        %v1480 = vunpack.c.l.b16 %v1464
        %v1481 = vunpack.c.l.b16 %v1465
        %v1482 = vunpack.c.l.b16 %v1466
        %v1483 = vpack.c.b16 %v1480, %v1479
        %v1484 = vpack.c.b16 %v1482, %v1481
        %1487 = vmatprep.subr.bf16.mxu0 0
        %1488 = vmatpush1.bf16.msra.mxu0 %v1483
        %1489 = vmatprep.subr.bf16.mxu0 0
        %1490 = vmatpush1.bf16.msra.mxu0 %v1484
        %1491 = vmatprep.subr.bf16.mxu0 0
        %1492 = vmatpush1.bf16.msra.mxu0 0
        %1493 = vmatprep.subr.bf16.mxu0 0
        %1494 = vmatpush1.bf16.msra.mxu0 0
        %1495 = vmatprep.subr.bf16.mxu0 0
        %1496 = vmatpush1.bf16.msra.mxu0 0
        %1497 = vmatprep.subr.bf16.mxu0 0
        %1498 = vmatpush1.bf16.msra.mxu0 0
        %1499 = vmatprep.subr.bf16.mxu0 0
        %1500 = vmatpush1.bf16.msra.mxu0 0
        %1501 = vmatprep.subr.bf16.mxu0 0
        %1502 = vmatpush1.bf16.msra.mxu0 0
        %1503 = vmatprep.subr.bf16.mxu0 0
        %1504 = vmatpush1.bf16.msra.mxu0 0
        %1505 = vmatprep.subr.bf16.mxu0 0
        %1506 = vmatpush1.bf16.msra.mxu0 0
        %1507 = vmatprep.subr.bf16.mxu0 0
        %1508 = vmatpush1.bf16.msra.mxu0 0
        %1509 = vmatprep.subr.bf16.mxu0 0
        %1510 = vmatpush1.bf16.msra.mxu0 0
        %1511 = vmatprep.subr.bf16.mxu0 0
        %1512 = vmatpush1.bf16.msra.mxu0 0
        %1513 = vmatprep.subr.bf16.mxu0 0
        %1514 = vmatpush1.bf16.msra.mxu0 0
        %1515 = vmatprep.subr.bf16.mxu0 0
        %1516 = vmatpush1.bf16.msra.mxu0 0
        %1517 = vmatprep.subr.bf16.mxu0 0
        %1518 = vmatpush1.bf16.msra.mxu0 0
        %1519 = vmatprep.mubr.bf16.mxu0 0
        %1520 = vmatmul.mubr.bf16.gmra.mrb[0].mxu0 %v1031
        %v1521 = vpop.f32.mrb[0].mxu0
        %v1522 = vadd.f32 %v1473, %v1521
        %v1523 = vpop.f32.mrb[0].mxu0
        %v1524 = vpop.f32.mrb[0].mxu0
        %v1525 = vpop.f32.mrb[0].mxu0
        %1526 = vdwg.mxu0
        %v1527 = vpack.c.bf16 %v1522, %v1522
        %s1528 = scalar_lea.vmem [#allocation2], 8
        %v1529 = vld [vmem:[%s1528] sm:$0xf]
        %v1531 = vsel %vm1075, %v1527, 0
        %v1534 = vsel %vm1079, %v1529, 0
        %1536 = vmatprep.subr.bf16.mxu0 0
        %1537 = vmatpush1.bf16.msra.mxu0 %v1534
        %1538 = vmatprep.subr.bf16.mxu0 0
        %1539 = vmatpush1.bf16.msra.mxu0 0
        %1540 = vmatprep.subr.bf16.mxu0 0
        %1541 = vmatpush1.bf16.msra.mxu0 0
        %1542 = vmatprep.subr.bf16.mxu0 0
        %1543 = vmatpush1.bf16.msra.mxu0 0
        %1544 = vmatprep.subr.bf16.mxu0 0
        %1545 = vmatpush1.bf16.msra.mxu0 0
        %1546 = vmatprep.subr.bf16.mxu0 0
        %1547 = vmatpush1.bf16.msra.mxu0 0
        %1548 = vmatprep.subr.bf16.mxu0 0
        %1549 = vmatpush1.bf16.msra.mxu0 0
        %1550 = vmatprep.subr.bf16.mxu0 0
        %1551 = vmatpush1.bf16.msra.mxu0 0
        %1552 = vmatprep.subr.bf16.mxu0 0
        %1553 = vmatpush1.bf16.msra.mxu0 0
        %1554 = vmatprep.subr.bf16.mxu0 0
        %1555 = vmatpush1.bf16.msra.mxu0 0
        %1556 = vmatprep.subr.bf16.mxu0 0
        %1557 = vmatpush1.bf16.msra.mxu0 0
        %1558 = vmatprep.subr.bf16.mxu0 0
        %1559 = vmatpush1.bf16.msra.mxu0 0
        %1560 = vmatprep.subr.bf16.mxu0 0
        %1561 = vmatpush1.bf16.msra.mxu0 0
        %1562 = vmatprep.subr.bf16.mxu0 0
        %1563 = vmatpush1.bf16.msra.mxu0 0
        %1564 = vmatprep.subr.bf16.mxu0 0
        %1565 = vmatpush1.bf16.msra.mxu0 0
        %1566 = vmatprep.subr.bf16.mxu0 0
        %1567 = vmatpush1.bf16.msra.mxu0 0
        %1568 = vmatprep.mubr.bf16.mxu0 0
        %1569 = vmatmul.mubr.bf16.gmra.mrb[0].mxu0 %v1531
        %v1570 = vpop.f32.mrb[0].mxu0
        %v1571 = vadd.f32 0.0, %v1570
        %v1572 = vpop.f32.mrb[0].mxu0
        %v1573 = vpop.f32.mrb[0].mxu0
        %v1574 = vpop.f32.mrb[0].mxu0
        %1575 = vdwg.mxu0
        %v1576 = vsel %vm1075, %v1571, -inf
        %1577 = vmax.xlane.f32.xlu0 %v1576
        %v1578 = vpop.xlane.xlu0 %1577
        %v1579 = vsub.f32 %v1571, %v1578
        %v1580 = vmul.f32 %v1579, 1.442695
        %v1581 = vpow.pop %v1580
        %v1582 = vsel %vm1075, %v1581, 0.0
        %1583 = vadd.xlane.f32.xlu0 %v1582
        %v1584 = vpop.xlane.xlu0 %1583
        %v1585 = vrcp.pop %v1584
        %v1586 = vmul.f32 %v1581, %v1585
        %s1587 = scalar_lea.vmem %s467, 16 [#allocation7]
        %1588 = vst.msk [vmem:[%s1587] sm:$0xff] %vm1075, %v1586
        %v1589 = vpack.c.bf16 %v1586, %v1586
        %s1590 = scalar_lea.vmem [#allocation3], 8
        %v1591 = vld [vmem:[%s1590] sm:$0xf]
        %v1593 = vsel %vm1075, %v1589, 0
        %v1596 = vsel %vm1079, %v1591, 0
        %1598 = vmatprep.subr.bf16.mxu0 0
        %1599 = vmatpush1.bf16.msra.mxu0 %v1596
        %1600 = vmatprep.subr.bf16.mxu0 0
        %1601 = vmatpush1.bf16.msra.mxu0 0
        %1602 = vmatprep.subr.bf16.mxu0 0
        %1603 = vmatpush1.bf16.msra.mxu0 0
        %1604 = vmatprep.subr.bf16.mxu0 0
        %1605 = vmatpush1.bf16.msra.mxu0 0
        %1606 = vmatprep.subr.bf16.mxu0 0
        %1607 = vmatpush1.bf16.msra.mxu0 0
        %1608 = vmatprep.subr.bf16.mxu0 0
        %1609 = vmatpush1.bf16.msra.mxu0 0
        %1610 = vmatprep.subr.bf16.mxu0 0
        %1611 = vmatpush1.bf16.msra.mxu0 0
        %1612 = vmatprep.subr.bf16.mxu0 0
        %1613 = vmatpush1.bf16.msra.mxu0 0
        %1614 = vmatprep.subr.bf16.mxu0 0
        %1615 = vmatpush1.bf16.msra.mxu0 0
        %1616 = vmatprep.subr.bf16.mxu0 0
        %1617 = vmatpush1.bf16.msra.mxu0 0
        %1618 = vmatprep.subr.bf16.mxu0 0
        %1619 = vmatpush1.bf16.msra.mxu0 0
        %1620 = vmatprep.subr.bf16.mxu0 0
        %1621 = vmatpush1.bf16.msra.mxu0 0
        %1622 = vmatprep.subr.bf16.mxu0 0
        %1623 = vmatpush1.bf16.msra.mxu0 0
        %1624 = vmatprep.subr.bf16.mxu0 0
        %1625 = vmatpush1.bf16.msra.mxu0 0
        %1626 = vmatprep.subr.bf16.mxu0 0
        %1627 = vmatpush1.bf16.msra.mxu0 0
        %1628 = vmatprep.subr.bf16.mxu0 0
        %1629 = vmatpush1.bf16.msra.mxu0 0
        %1630 = vmatprep.mubr.bf16.mxu0 0
        %1631 = vmatmul.mubr.bf16.gmra.mrb[0].mxu0 %v1593
        %v1632 = vpop.f32.mrb[0].mxu0
        %v1633 = vadd.f32 0.0, %v1632
        %v1634 = vpop.f32.mrb[0].mxu0
        %v1635 = vpop.f32.mrb[0].mxu0
        %v1636 = vpop.f32.mrb[0].mxu0
        %1637 = vdwg.mxu0
        %v1638 = vld [vmem:[#allocation4] sm:$0xff]
        %v1639 = vpack.c.bf16 %v1633, %v1633
        %s1640 = scalar_lea.vmem %s9, 8
        %v1641 = vld [vmem:[%s1640] sm:$0xf]
        %v1643 = vsel %vm1075, %v1639, 0
        %v1646 = vsel %vm1079, %v1641, 0
        %1648 = vmatprep.subr.bf16.mxu0 0
        %1649 = vmatpush1.bf16.msra.mxu0 %v1646
        %1650 = vmatprep.subr.bf16.mxu0 0
        %1651 = vmatpush1.bf16.msra.mxu0 0
        %1652 = vmatprep.subr.bf16.mxu0 0
        %1653 = vmatpush1.bf16.msra.mxu0 0
        %1654 = vmatprep.subr.bf16.mxu0 0
        %1655 = vmatpush1.bf16.msra.mxu0 0
        %1656 = vmatprep.subr.bf16.mxu0 0
        %1657 = vmatpush1.bf16.msra.mxu0 0
        %1658 = vmatprep.subr.bf16.mxu0 0
        %1659 = vmatpush1.bf16.msra.mxu0 0
        %1660 = vmatprep.subr.bf16.mxu0 0
        %1661 = vmatpush1.bf16.msra.mxu0 0
        %1662 = vmatprep.subr.bf16.mxu0 0
        %1663 = vmatpush1.bf16.msra.mxu0 0
        %1664 = vmatprep.subr.bf16.mxu0 0
        %1665 = vmatpush1.bf16.msra.mxu0 0
        %1666 = vmatprep.subr.bf16.mxu0 0
        %1667 = vmatpush1.bf16.msra.mxu0 0
        %1668 = vmatprep.subr.bf16.mxu0 0
        %1669 = vmatpush1.bf16.msra.mxu0 0
        %1670 = vmatprep.subr.bf16.mxu0 0
        %1671 = vmatpush1.bf16.msra.mxu0 0
        %1672 = vmatprep.subr.bf16.mxu0 0
        %1673 = vmatpush1.bf16.msra.mxu0 0
        %1674 = vmatprep.subr.bf16.mxu0 0
        %1675 = vmatpush1.bf16.msra.mxu0 0
        %1676 = vmatprep.subr.bf16.mxu0 0
        %1677 = vmatpush1.bf16.msra.mxu0 0
        %1678 = vmatprep.subr.bf16.mxu0 0
        %1679 = vmatpush1.bf16.msra.mxu0 0
        %1680 = vmatprep.mubr.bf16.mxu0 0
        %1681 = vmatmul.mubr.bf16.gmra.mrb[0].mxu0 %v1643
        %v1682 = vpop.f32.mrb[0].mxu0
        %v1683 = vadd.f32 0.0, %v1682
        %v1684 = vpop.f32.mrb[0].mxu0
        %v1685 = vpop.f32.mrb[0].mxu0
        %v1686 = vpop.f32.mrb[0].mxu0
        %1687 = vdwg.mxu0
        %v1688 = vadd.f32 %v1638, %v1683
        %1689 = vst.msk [vmem:[#allocation4] sm:$0xff] %vm1005, %v1688
        %s1690 = scalar_lea.vmem %s3, 48
        %v1691 = vld [vmem:[%s1690] sm:$0xf]
        %v1692 = vld [vmem:[%s1690 + $0x4] sm:$0xf]
        %v1693 = vld [vmem:[%s1690 + $0x8] sm:$0xf]
        %v1694 = vld [vmem:[%s1690 + $0xc] sm:$0xf]
        %s1695 = scalar_lea.vmem %s4, 3
        %v1696 = vld [vmem:[%s1695] sm:$0x1]
        %v1698 = vlaneseq
        %v1699 = vshrl.u32 %v1698, 7
        %v1700 = vsub.s32 0, %v1699
        %v1701 = vrot.slane %v1696, %v1700
        %v1707 = vunpack.c.l.b16 %v1691
        %v1708 = vunpack.c.l.b16 %v1692
        %v1709 = vunpack.c.l.b16 %v1693
        %v1710 = vunpack.c.l.b16 %v1694
        %v1711 = vpack.c.b16 %v1708, %v1707
        %v1712 = vpack.c.b16 %v1710, %v1709
        %1715 = vmatprep.subr.bf16.mxu0 0
        %1716 = vmatpush1.bf16.msra.mxu0 %v1711
        %1717 = vmatprep.subr.bf16.mxu0 0
        %1718 = vmatpush1.bf16.msra.mxu0 %v1712
        %1719 = vmatprep.subr.bf16.mxu0 0
        %1720 = vmatpush1.bf16.msra.mxu0 0
        %1721 = vmatprep.subr.bf16.mxu0 0
        %1722 = vmatpush1.bf16.msra.mxu0 0
        %1723 = vmatprep.subr.bf16.mxu0 0
        %1724 = vmatpush1.bf16.msra.mxu0 0
        %1725 = vmatprep.subr.bf16.mxu0 0
        %1726 = vmatpush1.bf16.msra.mxu0 0
        %1727 = vmatprep.subr.bf16.mxu0 0
        %1728 = vmatpush1.bf16.msra.mxu0 0
        %1729 = vmatprep.subr.bf16.mxu0 0
        %1730 = vmatpush1.bf16.msra.mxu0 0
        %1731 = vmatprep.subr.bf16.mxu0 0
        %1732 = vmatpush1.bf16.msra.mxu0 0
        %1733 = vmatprep.subr.bf16.mxu0 0
        %1734 = vmatpush1.bf16.msra.mxu0 0
        %1735 = vmatprep.subr.bf16.mxu0 0
        %1736 = vmatpush1.bf16.msra.mxu0 0
        %1737 = vmatprep.subr.bf16.mxu0 0
        %1738 = vmatpush1.bf16.msra.mxu0 0
        %1739 = vmatprep.subr.bf16.mxu0 0
        %1740 = vmatpush1.bf16.msra.mxu0 0
        %1741 = vmatprep.subr.bf16.mxu0 0
        %1742 = vmatpush1.bf16.msra.mxu0 0
        %1743 = vmatprep.subr.bf16.mxu0 0
        %1744 = vmatpush1.bf16.msra.mxu0 0
        %1745 = vmatprep.subr.bf16.mxu0 0
        %1746 = vmatpush1.bf16.msra.mxu0 0
        %1747 = vmatprep.mubr.bf16.mxu0 0
        %1748 = vmatmul.mubr.bf16.gmra.mrb[0].mxu0 %v1031
        %v1749 = vpop.f32.mrb[0].mxu0
        %v1750 = vadd.f32 %v1701, %v1749
        %v1751 = vpop.f32.mrb[0].mxu0
        %v1752 = vpop.f32.mrb[0].mxu0
        %v1753 = vpop.f32.mrb[0].mxu0
        %1754 = vdwg.mxu0
        %v1755 = vpack.c.bf16 %v1750, %v1750
        %s1756 = scalar_lea.vmem [#allocation2], 12
        %v1757 = vld [vmem:[%s1756] sm:$0xf]
        %v1759 = vsel %vm1075, %v1755, 0
        %v1762 = vsel %vm1079, %v1757, 0
        %1764 = vmatprep.subr.bf16.mxu0 0
        %1765 = vmatpush1.bf16.msra.mxu0 %v1762
        %1766 = vmatprep.subr.bf16.mxu0 0
        %1767 = vmatpush1.bf16.msra.mxu0 0
        %1768 = vmatprep.subr.bf16.mxu0 0
        %1769 = vmatpush1.bf16.msra.mxu0 0
        %1770 = vmatprep.subr.bf16.mxu0 0
        %1771 = vmatpush1.bf16.msra.mxu0 0
        %1772 = vmatprep.subr.bf16.mxu0 0
        %1773 = vmatpush1.bf16.msra.mxu0 0
        %1774 = vmatprep.subr.bf16.mxu0 0
        %1775 = vmatpush1.bf16.msra.mxu0 0
        %1776 = vmatprep.subr.bf16.mxu0 0
        %1777 = vmatpush1.bf16.msra.mxu0 0
        %1778 = vmatprep.subr.bf16.mxu0 0
        %1779 = vmatpush1.bf16.msra.mxu0 0
        %1780 = vmatprep.subr.bf16.mxu0 0
        %1781 = vmatpush1.bf16.msra.mxu0 0
        %1782 = vmatprep.subr.bf16.mxu0 0
        %1783 = vmatpush1.bf16.msra.mxu0 0
        %1784 = vmatprep.subr.bf16.mxu0 0
        %1785 = vmatpush1.bf16.msra.mxu0 0
        %1786 = vmatprep.subr.bf16.mxu0 0
        %1787 = vmatpush1.bf16.msra.mxu0 0
        %1788 = vmatprep.subr.bf16.mxu0 0
        %1789 = vmatpush1.bf16.msra.mxu0 0
        %1790 = vmatprep.subr.bf16.mxu0 0
        %1791 = vmatpush1.bf16.msra.mxu0 0
        %1792 = vmatprep.subr.bf16.mxu0 0
        %1793 = vmatpush1.bf16.msra.mxu0 0
        %1794 = vmatprep.subr.bf16.mxu0 0
        %1795 = vmatpush1.bf16.msra.mxu0 0
        %1796 = vmatprep.mubr.bf16.mxu0 0
        %1797 = vmatmul.mubr.bf16.gmra.mrb[0].mxu0 %v1759
        %v1798 = vpop.f32.mrb[0].mxu0
        %v1799 = vadd.f32 0.0, %v1798
        %v1800 = vpop.f32.mrb[0].mxu0
        %v1801 = vpop.f32.mrb[0].mxu0
        %v1802 = vpop.f32.mrb[0].mxu0
        %1803 = vdwg.mxu0
        %v1804 = vsel %vm1075, %v1799, -inf
        %1805 = vmax.xlane.f32.xlu0 %v1804
        %v1806 = vpop.xlane.xlu0 %1805
        %v1807 = vsub.f32 %v1799, %v1806
        %v1808 = vmul.f32 %v1807, 1.442695
        %v1809 = vpow.pop %v1808
        %v1810 = vsel %vm1075, %v1809, 0.0
        %1811 = vadd.xlane.f32.xlu0 %v1810
        %v1812 = vpop.xlane.xlu0 %1811
        %v1813 = vrcp.pop %v1812
        %v1814 = vmul.f32 %v1809, %v1813
        %s1815 = scalar_lea.vmem %s467, 24 [#allocation7]
        %1816 = vst.msk [vmem:[%s1815] sm:$0xff] %vm1075, %v1814
        %v1817 = vpack.c.bf16 %v1814, %v1814
        %s1818 = scalar_lea.vmem [#allocation3], 12
        %v1819 = vld [vmem:[%s1818] sm:$0xf]
        %v1821 = vsel %vm1075, %v1817, 0
        %v1824 = vsel %vm1079, %v1819, 0
        %1826 = vmatprep.subr.bf16.mxu0 0
        %1827 = vmatpush1.bf16.msra.mxu0 %v1824
        %1828 = vmatprep.subr.bf16.mxu0 0
        %1829 = vmatpush1.bf16.msra.mxu0 0
        %1830 = vmatprep.subr.bf16.mxu0 0
        %1831 = vmatpush1.bf16.msra.mxu0 0
        %1832 = vmatprep.subr.bf16.mxu0 0
        %1833 = vmatpush1.bf16.msra.mxu0 0
        %1834 = vmatprep.subr.bf16.mxu0 0
        %1835 = vmatpush1.bf16.msra.mxu0 0
        %1836 = vmatprep.subr.bf16.mxu0 0
        %1837 = vmatpush1.bf16.msra.mxu0 0
        %1838 = vmatprep.subr.bf16.mxu0 0
        %1839 = vmatpush1.bf16.msra.mxu0 0
        %1840 = vmatprep.subr.bf16.mxu0 0
        %1841 = vmatpush1.bf16.msra.mxu0 0
        %1842 = vmatprep.subr.bf16.mxu0 0
        %1843 = vmatpush1.bf16.msra.mxu0 0
        %1844 = vmatprep.subr.bf16.mxu0 0
        %1845 = vmatpush1.bf16.msra.mxu0 0
        %1846 = vmatprep.subr.bf16.mxu0 0
        %1847 = vmatpush1.bf16.msra.mxu0 0
        %1848 = vmatprep.subr.bf16.mxu0 0
        %1849 = vmatpush1.bf16.msra.mxu0 0
        %1850 = vmatprep.subr.bf16.mxu0 0
        %1851 = vmatpush1.bf16.msra.mxu0 0
        %1852 = vmatprep.subr.bf16.mxu0 0
        %1853 = vmatpush1.bf16.msra.mxu0 0
        %1854 = vmatprep.subr.bf16.mxu0 0
        %1855 = vmatpush1.bf16.msra.mxu0 0
        %1856 = vmatprep.subr.bf16.mxu0 0
        %1857 = vmatpush1.bf16.msra.mxu0 0
        %1858 = vmatprep.mubr.bf16.mxu0 0
        %1859 = vmatmul.mubr.bf16.gmra.mrb[0].mxu0 %v1821
        %v1860 = vpop.f32.mrb[0].mxu0
        %v1861 = vadd.f32 0.0, %v1860
        %v1862 = vpop.f32.mrb[0].mxu0
        %v1863 = vpop.f32.mrb[0].mxu0
        %v1864 = vpop.f32.mrb[0].mxu0
        %1865 = vdwg.mxu0
        %v1866 = vld [vmem:[#allocation4] sm:$0xff]
        %v1867 = vpack.c.bf16 %v1861, %v1861
        %s1868 = scalar_lea.vmem %s9, 12
        %v1869 = vld [vmem:[%s1868] sm:$0xf]
        %v1871 = vsel %vm1075, %v1867, 0
        %v1874 = vsel %vm1079, %v1869, 0
        %1876 = vmatprep.subr.bf16.mxu0 0
        %1877 = vmatpush1.bf16.msra.mxu0 %v1874
        %1878 = vmatprep.subr.bf16.mxu0 0
        %1879 = vmatpush1.bf16.msra.mxu0 0
        %1880 = vmatprep.subr.bf16.mxu0 0
        %1881 = vmatpush1.bf16.msra.mxu0 0
        %1882 = vmatprep.subr.bf16.mxu0 0
        %1883 = vmatpush1.bf16.msra.mxu0 0
        %1884 = vmatprep.subr.bf16.mxu0 0
        %1885 = vmatpush1.bf16.msra.mxu0 0
        %1886 = vmatprep.subr.bf16.mxu0 0
        %1887 = vmatpush1.bf16.msra.mxu0 0
        %1888 = vmatprep.subr.bf16.mxu0 0
        %1889 = vmatpush1.bf16.msra.mxu0 0
        %1890 = vmatprep.subr.bf16.mxu0 0
        %1891 = vmatpush1.bf16.msra.mxu0 0
        %1892 = vmatprep.subr.bf16.mxu0 0
        %1893 = vmatpush1.bf16.msra.mxu0 0
        %1894 = vmatprep.subr.bf16.mxu0 0
        %1895 = vmatpush1.bf16.msra.mxu0 0
        %1896 = vmatprep.subr.bf16.mxu0 0
        %1897 = vmatpush1.bf16.msra.mxu0 0
        %1898 = vmatprep.subr.bf16.mxu0 0
        %1899 = vmatpush1.bf16.msra.mxu0 0
        %1900 = vmatprep.subr.bf16.mxu0 0
        %1901 = vmatpush1.bf16.msra.mxu0 0
        %1902 = vmatprep.subr.bf16.mxu0 0
        %1903 = vmatpush1.bf16.msra.mxu0 0
        %1904 = vmatprep.subr.bf16.mxu0 0
        %1905 = vmatpush1.bf16.msra.mxu0 0
        %1906 = vmatprep.subr.bf16.mxu0 0
        %1907 = vmatpush1.bf16.msra.mxu0 0
        %1908 = vmatprep.mubr.bf16.mxu0 0
        %1909 = vmatmul.mubr.bf16.gmra.mrb[0].mxu0 %v1871
        %v1910 = vpop.f32.mrb[0].mxu0
        %v1911 = vadd.f32 0.0, %v1910
        %v1912 = vpop.f32.mrb[0].mxu0
        %v1913 = vpop.f32.mrb[0].mxu0
        %v1914 = vpop.f32.mrb[0].mxu0
        %1915 = vdwg.mxu0
        %v1916 = vadd.f32 %v1866, %v1911
        %1917 = vst.msk [vmem:[#allocation4] sm:$0xff] %vm1005, %v1916
        %v1918 = vld [vmem:[#allocation4] sm:$0xff]
        %1919 = vst.msk [vmem:[%s460] sm:$0xff] %vm1005, %v1918
        %s1920 = sand.u32 %s300, 1
        %s1921 = scalar_lea.sflag [#allocation6], %s1920
        %s1922 = sand.u32 %s300, 1
        %s1923 = smul.addr %s1922, 8
        %s1924 = scalar_lea.vmem [#allocation5], %s1923
        %s1925 = sand.u32 %s328, 1
        %s1926 = scalar_lea.sflag [#allocation8], %s1925
        %s1927 = sand.u32 %s328, 1
        %s1928 = smul.addr %s1927, 32
        %s1929 = scalar_lea.vmem [#allocation7], %s1928
        // Predicated region
        $region69: #{tpu_custom_call.1} parent=63 // pred_check
          %p1930 = pneg %p310
        $region70: #{tpu_custom_call.1} parent=63 // pred_check_branch
          %1932 = sbr.rel (%p1930) target = $region72
        $region71: #{tpu_custom_call.1} parent=63 // pred_region
          %s1934 = ssub.s32 128, 128
          %1935 = vsyncadd %s1921, %s1934
          %s1936 = sadd.s32 %s35, %s34
          %s1937 = smul.addr %s1936, 128
          %s1938 = scalar_lea.hbm %s11, %s1937
          %s1940 = sshll.u32 %s1924, 4
          %s1941 = int_to_ptr.vmem [resolvable:$true] %s1940
          %1943 = dma.vmem_to_hbm [thread:$0]  %s1941, 128, %s1938, %s1921
        $region72: #{tpu_custom_call.1} parent=63 // pred_fallthru
          _
        // Predicated region
        $region73: #{tpu_custom_call.1} parent=63 // pred_check
          %p1944 = pneg %p338
        $region74: #{tpu_custom_call.1} parent=63 // pred_check_branch
          %1946 = sbr.rel (%p1944) target = $region76
        $region75: #{tpu_custom_call.1} parent=63 // pred_region
          %s1948 = ssub.s32 512, 512
          %1949 = vsyncadd %s1926, %s1948
          %s1950 = smul.addr %s34, 4
          %s1951 = sadd.s32 %s35, %s1950
          %s1952 = smul.addr %s1951, 128
          %s1953 = scalar_lea.hbm %s12, %s1952
          %s1954 = sshll.u32 %s1929, 4
          %s1955 = int_to_ptr.vmem [resolvable:$true] %s1954
          %1960 = dma.vmem_to_hbm [thread:$0]  %s1955, 512, %s1953, %s1926, 128, 128, 8
        $region76: #{tpu_custom_call.1} parent=63 // pred_fallthru
          _
      $region64: #{tpu_custom_call.1} parent=5 // pred_fallthru
        _
      %p1961 = scmp.le.s32.totalorder 2, %s25
      // Predicated region
      $region77: #{tpu_custom_call.1} parent=5 // pred_check
        %p1962 = pneg %p1961
      $region78: #{tpu_custom_call.1} parent=5 // pred_check_branch
        %1964 = sbr.rel (%p1962) target = $region80
      $region79: #{tpu_custom_call.1} parent=5 // pred_region
        %s1965 = ssub.s32 %s25, 2
        // Predicated region
        $region81: #{tpu_custom_call.1} parent=79 // pred_check
          %p1966 = pneg %p316
        $region82: #{tpu_custom_call.1} parent=79 // pred_check_branch
          %1968 = sbr.rel (%p1966) target = $region84
        $region83: #{tpu_custom_call.1} parent=79 // pred_region
          %s1969 = sand.u32 %s301, 1
          %s1970 = scalar_lea.sflag [#allocation6], %s1969
          %s1971 = sand.u32 %s301, 1
          %s1972 = smul.addr %s1971, 8
          %s1973 = scalar_lea.vmem [#allocation5], %s1972
          %1974 = dma.done %s1970, 128
        $region84: #{tpu_custom_call.1} parent=79 // pred_fallthru
          _
        // Predicated region
        $region85: #{tpu_custom_call.1} parent=79 // pred_check
          %p1975 = pneg %p344
        $region86: #{tpu_custom_call.1} parent=79 // pred_check_branch
          %1977 = sbr.rel (%p1975) target = $region88
        $region87: #{tpu_custom_call.1} parent=79 // pred_region
          %s1978 = sand.u32 %s329, 1
          %s1979 = scalar_lea.sflag [#allocation8], %s1978
          %s1980 = sand.u32 %s329, 1
          %s1981 = smul.addr %s1980, 32
          %s1982 = scalar_lea.vmem [#allocation7], %s1981
          %1983 = dma.done %s1979, 512
        $region88: #{tpu_custom_call.1} parent=79 // pred_fallthru
          _
      $region80: #{tpu_custom_call.1} parent=5 // pred_fallthru
        _
    $region6: #{tpu_custom_call.1} parent=1 // loop_footer
      %s29 = sadd.s32 1, %s25
    $region7: #{tpu_custom_call.1} parent=1 // loop_footer_branch
      %24 = sbr.rel target = $region3
    $region8: #{tpu_custom_call.1} parent=1 // loop_exit
      _
    %1984 = vsyncpa [#allocation6], 1
    %s1985 = scalar_lea.sflag [#allocation6], 1
    %1986 = vsyncpa %s1985, 1
    %1987 = vsyncpa [#allocation8], 1
    %s1988 = scalar_lea.sflag [#allocation8], 1
    %1989 = vsyncpa %s1988, 1

</llo_original>
